<compile_context>
chip_gen: v6e
topology: v6e:2x2x1
jax: 0.10.0
libtpu: 0.0.40
codegen_flags: <defaults>
</compile_context>

<pallas_src>
import functools

import jax
import jax.numpy as jnp
from jax.experimental import pallas as pl
from jax.experimental.pallas import tpu as pltpu

EPS = 1e-5
LANE = 128


def _round_up(a, b):
    return (a + b - 1) // b * b


@functools.partial(jax.jit, static_argnames=("stride", "padding"))
def conv_block_forward(x_nchw, weight, bias, gamma, beta, *, stride=2, padding=1):
    """ConvBlock forward: Conv2d(3x3, s=2, p=1) -> BatchNorm2d (batch stats) -> ReLU."""
    del bias  # exactly absorbed by the BN mean subtraction (training-mode batch stats)
    N, Cin, H, W = x_nchw.shape
    Cout, _, KH, KW = weight.shape
    assert (KH, KW) == (3, 3) and stride == 2, (
        "kernel is specialised to the ConvBlock defaults (3x3, stride 2)")
    OH = (H + 2 * padding - KH) // stride + 1
    OW = (W + 2 * padding - KW) // stride + 1

    # Space-to-depth geometry: a stride-2 3x3 conv over x_pad is a dense 2x2 stride-1
    # conv over (Hp2, Wp2) cells with 4*Cin channels (7*Cin of the 16*Cin tap weights
    # are structural zeros -- harmless, pass 1 is memory-bound).
    Hp2 = (H + 2 * padding + 1) // 2          # == OH + 1
    Wp2 = (W + 2 * padding + 1) // 2          # == OW + 1
    Cin4 = 4 * Cin
    Cp = _round_up(Cout, LANE)                # lane-dense output channels

    R = N * OH * OW                           # real output pixels (BN count)
    R_EXT = OH * Wp2                          # rows computed per image (incl. junk col)
    R_EXT_P = _round_up(R_EXT, 16)            # bf16 sublane multiple
    CELLS = _round_up(max(Hp2 * Wp2, R_EXT_P + Wp2 + 1), 16)

    # VMEM budget (per grid step, double-buffered streams + resident weight + f32 acc):
    vmem_p1 = (2 * (CELLS * Cin4 * 2 + R_EXT_P * 4 + R_EXT_P * Cp * 2 + 2 * 8 * Cp * 4)
               + 4 * Cin4 * Cp * 2 + R_EXT_P * Cp * 4)
    assert vmem_p1 < 24 * 1024 * 1024, vmem_p1   # leaves headroom under v7x's 32 MiB scoped default

    # ---- glue (XLA, fused under this jit): NHWC, pad, space-to-depth pack, bf16 ----
    x = jnp.transpose(x_nchw, (0, 2, 3, 1))                              # NHWC
    x = jnp.pad(x, ((0, 0),
                    (padding, 2 * Hp2 - H - padding),
                    (padding, 2 * Wp2 - W - padding),
                    (0, 0))).astype(jnp.bfloat16)
    x = x.reshape(N, Hp2, 2, Wp2, 2, Cin)
    x = jnp.transpose(x, (0, 1, 3, 2, 4, 5)).reshape(N, Hp2 * Wp2, Cin4)  # s2d cells
    x2 = jnp.pad(x, ((0, 0), (0, CELLS - Hp2 * Wp2), (0, 0)))
    x2 = x2.reshape(N * CELLS, Cin4)                                      # (N*CELLS, 4Cin) bf16

    # weight (Cout,Cin,3,3) -> 2x2 tap matrices (4, 4Cin, Cp), zero where kh/kw == 3.
    w_hwio = jnp.transpose(weight, (2, 3, 1, 0)).astype(jnp.float32)      # (3,3,Cin,Cout)
    w4 = jnp.zeros((2, 2, 2, 2, Cin, Cout), jnp.float32)                  # [a,b,di,dj,c,co]
    for kh in range(KH):
        a, di = divmod(kh, 2)
        for kw in range(KW):
            b, dj = divmod(kw, 2)
            w4 = w4.at[a, b, di, dj].set(w_hwio[kh, kw])
    w_taps = w4.reshape(4, Cin4, Cout)
    w_taps = jnp.pad(w_taps, ((0, 0), (0, 0), (0, Cp - Cout))).astype(jnp.bfloat16)

    # Row-validity mask (same for every image): 0.0 for the junk column (ow == OW) and
    # the sublane padding rows, 1.0 for the R = N*OH*OW real pixels.
    re_idx = jnp.arange(R_EXT_P, dtype=jnp.int32)
    valid = ((re_idx % Wp2) != (Wp2 - 1)) & (re_idx < R_EXT)
    mask = valid.astype(jnp.float32).reshape(R_EXT_P, 1)

    gamma_p = jnp.pad(gamma.astype(jnp.float32).reshape(1, Cout), ((0, 0), (0, Cp - Cout)))
    beta_p = jnp.pad(beta.astype(jnp.float32).reshape(1, Cout), ((0, 0), (0, Cp - Cout)))

    # -------- pass 1: in-kernel conv (4 shifted matmuls) + per-image channel stats ----
    def conv_stats_kernel(x_ref, w_ref, m_ref, y_ref, sum_ref, sq_ref):
        # x_ref:  (CELLS, 4Cin)  bf16  s2d cells of one image (resident, zero padded)
        # w_ref:  (4, 4Cin, Cp)  bf16  tap weights (resident)
        # m_ref:  (R_EXT_P, 1)   f32   row-validity mask
        # y_ref:  (R_EXT_P, Cp)  bf16  pre-BN conv rows of this image
        # sum/sq: (8, Cp)        f32   per-image channel sum / sumsq (row 0, rest zero)
        acc = jnp.zeros((R_EXT_P, Cp), jnp.float32)
        for t in range(4):                                       # unrolled: 4 MXU calls
            a, b = divmod(t, 2)
            xs = x_ref[pl.ds(a * Wp2 + b, R_EXT_P), :]           # unit-stride shifted window
            acc += jnp.dot(xs, w_ref[t], preferred_element_type=jnp.float32)
        ym = acc * m_ref[...]                                    # junk/pad rows -> 0 for stats
        sum_ref[...] = jnp.zeros_like(sum_ref)
        sq_ref[...] = jnp.zeros_like(sq_ref)
        sum_ref[0:1, :] = jnp.sum(ym, axis=0, keepdims=True)
        sq_ref[0:1, :] = jnp.sum(ym * acc, axis=0, keepdims=True)
        y_ref[...] = acc.astype(y_ref.dtype)

    cost1 = pl.CostEstimate(
        flops=2 * N * 4 * R_EXT_P * Cin4 * Cp,
        transcendentals=0,
        bytes_accessed=(N * CELLS * Cin4 * 2 + 4 * Cin4 * Cp * 2
                        + N * R_EXT_P * Cp * 2 + 2 * N * 8 * Cp * 4))

    y, ysum, ysq = pl.pallas_call(
        conv_stats_kernel,
        out_shape=(jax.ShapeDtypeStruct((N * R_EXT_P, Cp), jnp.bfloat16),
                   jax.ShapeDtypeStruct((N * 8, Cp), jnp.float32),
                   jax.ShapeDtypeStruct((N * 8, Cp), jnp.float32)),
        grid=(N,),
        in_specs=[pl.BlockSpec((CELLS, Cin4), lambda n: (n, 0)),
                  pl.BlockSpec((4, Cin4, Cp), lambda n: (0, 0, 0)),
                  pl.BlockSpec((R_EXT_P, 1), lambda n: (0, 0))],
        out_specs=(pl.BlockSpec((R_EXT_P, Cp), lambda n: (n, 0)),
                   pl.BlockSpec((8, Cp), lambda n: (n, 0)),
                   pl.BlockSpec((8, Cp), lambda n: (n, 0))),
        compiler_params=pltpu.CompilerParams(dimension_semantics=("parallel",)),
        cost_estimate=cost1,
    )(x2, w_taps, mask)

    # -------- pass 2: fused BN fold + normalize + ReLU (aliased onto y) ---------------
    inv_count = 1.0 / float(R)

    def bn_relu_kernel(y_ref, sum_ref, sq_ref, g_ref, b_ref, o_ref):
        s = jnp.sum(sum_ref[...], axis=0, keepdims=True)         # (1, Cp)
        sq = jnp.sum(sq_ref[...], axis=0, keepdims=True)
        mean = s * inv_count
        # Biased variance; the clamp guards the E[y^2]-mean^2 cancellation.
        # TODO(synk): switch to centred / Welford partial stats if |mean| >> std ever matters.
        var = jnp.maximum(sq * inv_count - mean * mean, 0.0)
        scale = g_ref[...] * jax.lax.rsqrt(var + EPS)            # EUP slot, effectively free
        shift = b_ref[...] - mean * scale
        yv = y_ref[...].astype(jnp.float32)
        o_ref[...] = jnp.maximum(yv * scale + shift, 0.0).astype(o_ref.dtype)

    cost2 = pl.CostEstimate(
        flops=4 * N * R_EXT_P * Cp,
        transcendentals=Cp,
        bytes_accessed=2 * N * R_EXT_P * Cp * 2 + 2 * N * 8 * Cp * 4 + 2 * Cp * 4)

    out = pl.pallas_call(
        bn_relu_kernel,
        out_shape=jax.ShapeDtypeStruct((N * R_EXT_P, Cp), jnp.bfloat16),
        grid=(N,),
        in_specs=[pl.BlockSpec((R_EXT_P, Cp), lambda n: (n, 0)),
                  pl.BlockSpec((N * 8, Cp), lambda n: (0, 0)),
                  pl.BlockSpec((N * 8, Cp), lambda n: (0, 0)),
                  pl.BlockSpec((1, Cp), lambda n: (0, 0)),
                  pl.BlockSpec((1, Cp), lambda n: (0, 0))],
        out_specs=pl.BlockSpec((R_EXT_P, Cp), lambda n: (n, 0)),
        input_output_aliases={0: 0},          # y is dead after this pass; reuse its HBM
        compiler_params=pltpu.CompilerParams(dimension_semantics=("parallel",)),
        cost_estimate=cost2,
    )(y, ysum, ysq, gamma_p, beta_p)

    # ---- strip junk column / padding; back to NCHW (module's output layout) ----------
    out = out.reshape(N, R_EXT_P, Cp)[:, :R_EXT, :Cout]
    out = out.reshape(N, OH, Wp2, Cout)[:, :, :OW, :].astype(jnp.float32)
    # TODO(synk): return NHWC directly if the consumer allows; this transpose exists
    # only to match the PyTorch module's NCHW output.
    return jnp.transpose(out, (0, 3, 1, 2))


def _reference(x, weight, bias, gamma, beta, *, stride=2, padding=1):
    """Pure-JAX f32 reference: Conv2d -> BatchNorm2d (batch stats) -> ReLU."""
    y = jax.lax.conv_general_dilated(
        x, weight, window_strides=(stride, stride),
        padding=((padding, padding), (padding, padding)),
        dimension_numbers=("NCHW", "OIHW", "NCHW"))
    y = y + bias.reshape(1, -1, 1, 1)
    mean = y.mean(axis=(0, 2, 3), keepdims=True)
    var = ((y - mean) ** 2).mean(axis=(0, 2, 3), keepdims=True)
    y = (y - mean) * jax.lax.rsqrt(var + EPS)
    y = y * gamma.reshape(1, -1, 1, 1) + beta.reshape(1, -1, 1, 1)
    return jnp.maximum(y, 0.0)


if __name__ == "__main__":
    # Small, ConvBlock-consistent shapes: N=2, Cin=4, H=W=16, Cout=8.
    N, Cin, H, W = 2, 4, 16, 16
    Cout, KH, KW = 8, 3, 3

    key = jax.random.PRNGKey(0)
    kx, kw, kb = jax.random.split(key, 3)

    x = jax.random.normal(kx, (N, Cin, H, W), dtype=jnp.float32)

    # Deterministic parameter init (kaiming-uniform-like bounds).
    fan_in = Cin * KH * KW
    bound = 1.0 / (fan_in ** 0.5)
    weight = jax.random.uniform(kw, (Cout, Cin, KH, KW),
                                minval=-bound, maxval=bound, dtype=jnp.float32)
    bias = jax.random.uniform(kb, (Cout,),
                              minval=-bound, maxval=bound, dtype=jnp.float32)
    gamma = jnp.ones((Cout,), dtype=jnp.float32)   # BN weight init
    beta = jnp.zeros((Cout,), dtype=jnp.float32)   # BN bias init

    y = conv_block_forward(x, weight, bias, gamma, beta, stride=2, padding=1)
    jax.block_until_ready(y)
    assert y.shape == (N, Cout, H // 2, W // 2), y.shape

    # Loose tolerance: the kernel feeds the MXU in bf16 and stores y in bf16
    # (all accumulation / statistics in f32).
    y_ref = _reference(x, weight, bias, gamma, beta, stride=2, padding=1)
    err = float(jnp.max(jnp.abs(y - y_ref)))
    assert err < 1e-1, f"max abs error vs f32 reference too large: {err}"

    print("KERNEL_OK")
</pallas_src>

<mosaic_0001>
module attributes {stable_mosaic.version = 11 : i64} {
  func.func @conv_stats_kernel(%arg0: i32, %arg1: memref<96x16xbf16, #tpu.memory_space<vmem>>, %arg2: memref<4x16x128xbf16, #tpu.memory_space<vmem>>, %arg3: memref<80x1xf32, #tpu.memory_space<vmem>>, %arg4: memref<80x128xbf16, #tpu.memory_space<vmem>>, %arg5: memref<8x128xf32, #tpu.memory_space<vmem>>, %arg6: memref<8x128xf32, #tpu.memory_space<vmem>>) attributes {dimension_semantics = [#tpu.dimension_semantics<parallel>], iteration_bounds = array<i64: 2>, scalar_prefetch = 0 : i64, scratch_operands = 0 : i64, tpu.core_type = #tpu.core_type<tc>, window_params = [{transform_indices = @transform_0, window_bounds = array<i64: 96, 16>}, {pipeline_mode = #tpu.pipeline_mode<synchronous>, transform_indices = @transform_1, window_bounds = array<i64: 4, 16, 128>}, {pipeline_mode = #tpu.pipeline_mode<synchronous>, transform_indices = @transform_2, window_bounds = array<i64: 80, 1>}, {transform_indices = @transform_3, window_bounds = array<i64: 80, 128>}, {transform_indices = @transform_4, window_bounds = array<i64: 8, 128>}, {transform_indices = @transform_5, window_bounds = array<i64: 8, 128>}]} {
    %cst = arith.constant 0.000000e+00 : f32
    %0 = vector.broadcast %cst : f32 to vector<80x128xf32>
    %c0 = arith.constant 0 : index
    %c0_0 = arith.constant 0 : index
    %1 = vector.load %arg1[%c0, %c0_0] : memref<96x16xbf16, #tpu.memory_space<vmem>>, vector<80x16xbf16>
    %c0_1 = arith.constant 0 : index
    %c0_2 = arith.constant 0 : index
    %c0_3 = arith.constant 0 : index
    %2 = vector.load %arg2[%c0_1, %c0_2, %c0_3] : memref<4x16x128xbf16, #tpu.memory_space<vmem>>, vector<1x16x128xbf16>
    %3 = vector.shape_cast %2 : vector<1x16x128xbf16> to vector<16x128xbf16>
    %cst_4 = arith.constant dense<0.000000e+00> : vector<80x128xf32>
    %4 = tpu.matmul %1, %3, %cst_4 {dimension_numbers = #tpu.dot_dimension_numbers<[1], [0], [0], [1], [0, 0, 1, 1], [], []>} : vector<80x16xbf16>, vector<16x128xbf16>, vector<80x128xf32> -> vector<80x128xf32>
    %5 = arith.addf %0, %4 : vector<80x128xf32>
    %c1 = arith.constant 1 : index
    %c0_5 = arith.constant 0 : index
    %6 = vector.load %arg1[%c1, %c0_5] : memref<96x16xbf16, #tpu.memory_space<vmem>>, vector<80x16xbf16>
    %c1_6 = arith.constant 1 : index
    %c0_7 = arith.constant 0 : index
    %c0_8 = arith.constant 0 : index
    %7 = vector.load %arg2[%c1_6, %c0_7, %c0_8] : memref<4x16x128xbf16, #tpu.memory_space<vmem>>, vector<1x16x128xbf16>
    %8 = vector.shape_cast %7 : vector<1x16x128xbf16> to vector<16x128xbf16>
    %cst_9 = arith.constant dense<0.000000e+00> : vector<80x128xf32>
    %9 = tpu.matmul %6, %8, %cst_9 {dimension_numbers = #tpu.dot_dimension_numbers<[1], [0], [0], [1], [0, 0, 1, 1], [], []>} : vector<80x16xbf16>, vector<16x128xbf16>, vector<80x128xf32> -> vector<80x128xf32>
    %10 = arith.addf %5, %9 : vector<80x128xf32>
    %c9 = arith.constant 9 : index
    %c0_10 = arith.constant 0 : index
    %11 = vector.load %arg1[%c9, %c0_10] : memref<96x16xbf16, #tpu.memory_space<vmem>>, vector<80x16xbf16>
    %c2 = arith.constant 2 : index
    %c0_11 = arith.constant 0 : index
    %c0_12 = arith.constant 0 : index
    %12 = vector.load %arg2[%c2, %c0_11, %c0_12] : memref<4x16x128xbf16, #tpu.memory_space<vmem>>, vector<1x16x128xbf16>
    %13 = vector.shape_cast %12 : vector<1x16x128xbf16> to vector<16x128xbf16>
    %cst_13 = arith.constant dense<0.000000e+00> : vector<80x128xf32>
    %14 = tpu.matmul %11, %13, %cst_13 {dimension_numbers = #tpu.dot_dimension_numbers<[1], [0], [0], [1], [0, 0, 1, 1], [], []>} : vector<80x16xbf16>, vector<16x128xbf16>, vector<80x128xf32> -> vector<80x128xf32>
    %15 = arith.addf %10, %14 : vector<80x128xf32>
    %c10 = arith.constant 10 : index
    %c0_14 = arith.constant 0 : index
    %16 = vector.load %arg1[%c10, %c0_14] : memref<96x16xbf16, #tpu.memory_space<vmem>>, vector<80x16xbf16>
    %c3 = arith.constant 3 : index
    %c0_15 = arith.constant 0 : index
    %c0_16 = arith.constant 0 : index
    %17 = vector.load %arg2[%c3, %c0_15, %c0_16] : memref<4x16x128xbf16, #tpu.memory_space<vmem>>, vector<1x16x128xbf16>
    %18 = vector.shape_cast %17 : vector<1x16x128xbf16> to vector<16x128xbf16>
    %cst_17 = arith.constant dense<0.000000e+00> : vector<80x128xf32>
    %19 = tpu.matmul %16, %18, %cst_17 {dimension_numbers = #tpu.dot_dimension_numbers<[1], [0], [0], [1], [0, 0, 1, 1], [], []>} : vector<80x16xbf16>, vector<16x128xbf16>, vector<80x128xf32> -> vector<80x128xf32>
    %20 = arith.addf %15, %19 : vector<80x128xf32>
    %c0_18 = arith.constant 0 : index
    %c0_19 = arith.constant 0 : index
    %21 = vector.load %arg3[%c0_18, %c0_19] : memref<80x1xf32, #tpu.memory_space<vmem>>, vector<80x1xf32>
    %22 = vector.broadcast %21 : vector<80x1xf32> to vector<80x128xf32>
    %23 = arith.mulf %20, %22 : vector<80x128xf32>
    %cst_20 = arith.constant 0.000000e+00 : f32
    %24 = vector.broadcast %cst_20 : f32 to vector<8x128xf32>
    %c0_21 = arith.constant 0 : index
    %c0_22 = arith.constant 0 : index
    %25 = vector.load %arg5[%c0_21, %c0_22] : memref<8x128xf32, #tpu.memory_space<vmem>>, vector<8x128xf32>
    tpu.vector_store %arg5[%c0_21, %c0_22], %24 {strides = array<i32>} : memref<8x128xf32, #tpu.memory_space<vmem>>, vector<8x128xf32>,
    %cst_23 = arith.constant 0.000000e+00 : f32
    %26 = vector.broadcast %cst_23 : f32 to vector<8x128xf32>
    %c0_24 = arith.constant 0 : index
    %c0_25 = arith.constant 0 : index
    %27 = vector.load %arg6[%c0_24, %c0_25] : memref<8x128xf32, #tpu.memory_space<vmem>>, vector<8x128xf32>
    tpu.vector_store %arg6[%c0_24, %c0_25], %26 {strides = array<i32>} : memref<8x128xf32, #tpu.memory_space<vmem>>, vector<8x128xf32>,
    %cst_26 = arith.constant dense<0.000000e+00> : vector<128xf32>
    %28 = vector.multi_reduction <add>, %23, %cst_26 [0] : vector<80x128xf32> to vector<128xf32>
    %29 = vector.shape_cast %28 : vector<128xf32> to vector<1x128xf32>
    %c0_27 = arith.constant 0 : index
    %c0_28 = arith.constant 0 : index
    %30 = vector.load %arg5[%c0_27, %c0_28] : memref<8x128xf32, #tpu.memory_space<vmem>>, vector<1x128xf32>
    tpu.vector_store %arg5[%c0_27, %c0_28], %29 {strides = array<i32>} : memref<8x128xf32, #tpu.memory_space<vmem>>, vector<1x128xf32>,
    %31 = arith.mulf %23, %20 : vector<80x128xf32>
    %cst_29 = arith.constant dense<0.000000e+00> : vector<128xf32>
    %32 = vector.multi_reduction <add>, %31, %cst_29 [0] : vector<80x128xf32> to vector<128xf32>
    %33 = vector.shape_cast %32 : vector<128xf32> to vector<1x128xf32>
    %c0_30 = arith.constant 0 : index
    %c0_31 = arith.constant 0 : index
    %34 = vector.load %arg6[%c0_30, %c0_31] : memref<8x128xf32, #tpu.memory_space<vmem>>, vector<1x128xf32>
    tpu.vector_store %arg6[%c0_30, %c0_31], %33 {strides = array<i32>} : memref<8x128xf32, #tpu.memory_space<vmem>>, vector<1x128xf32>,
    %35 = arith.truncf %20 : vector<80x128xf32> to vector<80x128xbf16>
    %c0_32 = arith.constant 0 : index
    %c0_33 = arith.constant 0 : index
    %36 = vector.load %arg4[%c0_32, %c0_33] : memref<80x128xbf16, #tpu.memory_space<vmem>>, vector<80x128xbf16>
    tpu.vector_store %arg4[%c0_32, %c0_33], %35 {strides = array<i32>} : memref<80x128xbf16, #tpu.memory_space<vmem>>, vector<80x128xbf16>,
    return
  }
  func.func @transform_0(%arg0: i32) -> (i32, i32) {
    %c0_i32 = arith.constant 0 : i32
    %c0_i32_0 = arith.constant 0 : i32
    return %arg0, %c0_i32 : i32, i32
  }
  func.func @transform_1(%arg0: i32) -> (i32, i32, i32) {
    %c0_i32 = arith.constant 0 : i32
    %c0_i32_0 = arith.constant 0 : i32
    %c0_i32_1 = arith.constant 0 : i32
    %c0_i32_2 = arith.constant 0 : i32
    return %c0_i32, %c0_i32_0, %c0_i32_1 : i32, i32, i32
  }
  func.func @transform_2(%arg0: i32) -> (i32, i32) {
    %c0_i32 = arith.constant 0 : i32
    %c0_i32_0 = arith.constant 0 : i32
    %c0_i32_1 = arith.constant 0 : i32
    return %c0_i32, %c0_i32_0 : i32, i32
  }
  func.func @transform_3(%arg0: i32) -> (i32, i32) {
    %c0_i32 = arith.constant 0 : i32
    %c0_i32_0 = arith.constant 0 : i32
    return %arg0, %c0_i32 : i32, i32
  }
  func.func @transform_4(%arg0: i32) -> (i32, i32) {
    %c0_i32 = arith.constant 0 : i32
    %c0_i32_0 = arith.constant 0 : i32
    return %arg0, %c0_i32 : i32, i32
  }
  func.func @transform_5(%arg0: i32) -> (i32, i32) {
    %c0_i32 = arith.constant 0 : i32
    %c0_i32_0 = arith.constant 0 : i32
    return %arg0, %c0_i32 : i32, i32
  }
}

module attributes {stable_mosaic.version = 11 : i64} {
  func.func @bn_relu_kernel(%arg0: i32, %arg1: memref<80x128xbf16, #tpu.memory_space<vmem>>, %arg2: memref<16x128xf32, #tpu.memory_space<vmem>>, %arg3: memref<16x128xf32, #tpu.memory_space<vmem>>, %arg4: memref<1x128xf32, #tpu.memory_space<vmem>>, %arg5: memref<1x128xf32, #tpu.memory_space<vmem>>, %arg6: memref<80x128xbf16, #tpu.memory_space<vmem>>) attributes {dimension_semantics = [#tpu.dimension_semantics<parallel>], iteration_bounds = array<i64: 2>, scalar_prefetch = 0 : i64, scratch_operands = 0 : i64, tpu.core_type = #tpu.core_type<tc>, window_params = [{transform_indices = @transform_0, window_bounds = array<i64: 80, 128>}, {pipeline_mode = #tpu.pipeline_mode<synchronous>, transform_indices = @transform_1, window_bounds = array<i64: 16, 128>}, {pipeline_mode = #tpu.pipeline_mode<synchronous>, transform_indices = @transform_2, window_bounds = array<i64: 16, 128>}, {pipeline_mode = #tpu.pipeline_mode<synchronous>, transform_indices = @transform_3, window_bounds = array<i64: 1, 128>}, {pipeline_mode = #tpu.pipeline_mode<synchronous>, transform_indices = @transform_4, window_bounds = array<i64: 1, 128>}, {transform_indices = @transform_5, window_bounds = array<i64: 80, 128>}]} {
    %c0 = arith.constant 0 : index
    %c0_0 = arith.constant 0 : index
    %0 = vector.load %arg2[%c0, %c0_0] : memref<16x128xf32, #tpu.memory_space<vmem>>, vector<16x128xf32>
    %cst = arith.constant dense<0.000000e+00> : vector<128xf32>
    %1 = vector.multi_reduction <add>, %0, %cst [0] : vector<16x128xf32> to vector<128xf32>
    %2 = vector.shape_cast %1 : vector<128xf32> to vector<1x128xf32>
    %c0_1 = arith.constant 0 : index
    %c0_2 = arith.constant 0 : index
    %3 = vector.load %arg3[%c0_1, %c0_2] : memref<16x128xf32, #tpu.memory_space<vmem>>, vector<16x128xf32>
    %cst_3 = arith.constant dense<0.000000e+00> : vector<128xf32>
    %4 = vector.multi_reduction <add>, %3, %cst_3 [0] : vector<16x128xf32> to vector<128xf32>
    %5 = vector.shape_cast %4 : vector<128xf32> to vector<1x128xf32>
    %cst_4 = arith.constant 7.812500e-03 : f32
    %6 = vector.broadcast %cst_4 : f32 to vector<1x128xf32>
    %7 = arith.mulf %2, %6 : vector<1x128xf32>
    %cst_5 = arith.constant 7.812500e-03 : f32
    %8 = vector.broadcast %cst_5 : f32 to vector<1x128xf32>
    %9 = arith.mulf %5, %8 : vector<1x128xf32>
    %10 = arith.mulf %7, %7 : vector<1x128xf32>
    %11 = arith.subf %9, %10 : vector<1x128xf32>
    %cst_6 = arith.constant 0.000000e+00 : f32
    %12 = vector.broadcast %cst_6 : f32 to vector<1x128xf32>
    %13 = arith.maximumf %11, %12 : vector<1x128xf32>
    %c0_7 = arith.constant 0 : index
    %c0_8 = arith.constant 0 : index
    %14 = vector.load %arg4[%c0_7, %c0_8] : memref<1x128xf32, #tpu.memory_space<vmem>>, vector<1x128xf32>
    %cst_9 = arith.constant 9.99999974E-6 : f32
    %15 = vector.broadcast %cst_9 : f32 to vector<1x128xf32>
    %16 = arith.addf %13, %15 : vector<1x128xf32>
    %17 = math.rsqrt %16 : vector<1x128xf32>
    %18 = arith.mulf %14, %17 : vector<1x128xf32>
    %c0_10 = arith.constant 0 : index
    %c0_11 = arith.constant 0 : index
    %19 = vector.load %arg5[%c0_10, %c0_11] : memref<1x128xf32, #tpu.memory_space<vmem>>, vector<1x128xf32>
    %20 = arith.mulf %7, %18 : vector<1x128xf32>
    %21 = arith.subf %19, %20 : vector<1x128xf32>
    %c0_12 = arith.constant 0 : index
    %c0_13 = arith.constant 0 : index
    %22 = vector.load %arg1[%c0_12, %c0_13] : memref<80x128xbf16, #tpu.memory_space<vmem>>, vector<80x128xbf16>
    %23 = arith.extf %22 : vector<80x128xbf16> to vector<80x128xf32>
    %24 = vector.broadcast %18 : vector<1x128xf32> to vector<80x128xf32>
    %25 = arith.mulf %23, %24 : vector<80x128xf32>
    %26 = vector.broadcast %21 : vector<1x128xf32> to vector<80x128xf32>
    %27 = arith.addf %25, %26 : vector<80x128xf32>
    %cst_14 = arith.constant 0.000000e+00 : f32
    %28 = vector.broadcast %cst_14 : f32 to vector<80x128xf32>
    %29 = arith.maximumf %27, %28 : vector<80x128xf32>
    %30 = arith.truncf %29 : vector<80x128xf32> to vector<80x128xbf16>
    %c0_15 = arith.constant 0 : index
    %c0_16 = arith.constant 0 : index
    %31 = vector.load %arg6[%c0_15, %c0_16] : memref<80x128xbf16, #tpu.memory_space<vmem>>, vector<80x128xbf16>
    tpu.vector_store %arg6[%c0_15, %c0_16], %30 {strides = array<i32>} : memref<80x128xbf16, #tpu.memory_space<vmem>>, vector<80x128xbf16>,
    return
  }
  func.func @transform_0(%arg0: i32) -> (i32, i32) {
    %c0_i32 = arith.constant 0 : i32
    %c0_i32_0 = arith.constant 0 : i32
    return %arg0, %c0_i32 : i32, i32
  }
  func.func @transform_1(%arg0: i32) -> (i32, i32) {
    %c0_i32 = arith.constant 0 : i32
    %c0_i32_0 = arith.constant 0 : i32
    %c0_i32_1 = arith.constant 0 : i32
    return %c0_i32, %c0_i32_0 : i32, i32
  }
  func.func @transform_2(%arg0: i32) -> (i32, i32) {
    %c0_i32 = arith.constant 0 : i32
    %c0_i32_0 = arith.constant 0 : i32
    %c0_i32_1 = arith.constant 0 : i32
    return %c0_i32, %c0_i32_0 : i32, i32
  }
  func.func @transform_3(%arg0: i32) -> (i32, i32) {
    %c0_i32 = arith.constant 0 : i32
    %c0_i32_0 = arith.constant 0 : i32
    %c0_i32_1 = arith.constant 0 : i32
    return %c0_i32, %c0_i32_0 : i32, i32
  }
  func.func @transform_4(%arg0: i32) -> (i32, i32) {
    %c0_i32 = arith.constant 0 : i32
    %c0_i32_0 = arith.constant 0 : i32
    %c0_i32_1 = arith.constant 0 : i32
    return %c0_i32, %c0_i32_0 : i32, i32
  }
  func.func @transform_5(%arg0: i32) -> (i32, i32) {
    %c0_i32 = arith.constant 0 : i32
    %c0_i32_0 = arith.constant 0 : i32
    return %arg0, %c0_i32 : i32, i32
  }
}

</mosaic_0001>

<llo_original>
// kernel: conv_block_forward.3
$region0: #{conv_block_forward.3}
  #allocation0 [shape = 'u32[]', space=smem, size = 0x4, offset = 0x4, fixed_abs, tag = 'smem constant byte address 0x4 - core index']
  #allocation1 [shape = 'u32[144,128]{1,0:T(1,128)}', space=vmem, size = 0x12000, scoped, tag = 'internal scratch']
  %s0 = inlined_call_operand.vmem [shape: bf16[160,128], index: 0, kind: input, shape index: {}, may-alias: {0,5}]
  %s1 = inlined_call_operand.vmem [shape: f32[16,128], index: 1, kind: input, shape index: {}]
  %s2 = inlined_call_operand.vmem [shape: f32[16,128], index: 2, kind: input, shape index: {}]
  %s3 = inlined_call_operand.vmem [shape: f32[1,128], index: 3, kind: input, shape index: {}]
  %s4 = inlined_call_operand.vmem [shape: f32[1,128], index: 4, kind: input, shape index: {}]
  %s5 = inlined_call_operand.vmem [shape: bf16[160,128], index: 5, kind: output, shape index: {}, may-alias: {0,5}]
  %s6 = sld [smem:[#allocation0]]
  $region53: #{conv_block_forward.3} parent=0
    _
  %s8 = ssub.s32 1, %s6
  %s9 = scalar_select 0, %s8, %s6
  loop: start=0, step=1, limit=4
  $region2: #{conv_block_forward.3} parent=0 // loop_pre_header
    _
  $region3: #{conv_block_forward.3} parent=0 // loop_header
    %s11 = sphi 0, %s15
    %p12 = scmp.ge.s32.totalorder %s11, 4
    %s21 = sphi 0, %s23
    %s24 = sphi 0, %s21
    %s25 = sphi 0, %s24
    %s41 = sphi 0, %s25
    %s45 = sphi 0, %s45
    %s47 = sphi 0, %s45
    %s48 = sphi 0, %s47
    %s62 = sphi 0, %s48
    %s66 = sphi 0, %s66
    %s68 = sphi 0, %s66
    %s69 = sphi 0, %s68
    %s83 = sphi 0, %s69
    %s87 = sphi 0, %s87
    %s89 = sphi 0, %s87
    %s90 = sphi 0, %s89
    %s104 = sphi 0, %s90
    %s108 = sphi 0, %s108
    %s110 = sphi 0, %s108
    %s111 = sphi 0, %s110
    %s125 = sphi 0, %s111
    %s131 = sphi 0, %s133
    %s134 = sphi 0, %s131
    %s135 = sphi 0, %s134
    %s151 = sphi 0, %s135
  $region4: #{conv_block_forward.3} parent=0 // loop_header_branch
    %14 = sbr.rel (%p12) target = $region8
  $region5: #{conv_block_forward.3} parent=0 // loop_body
    %s16 = ssub.s32 %s11, 1
    %s17 = ssub.s32 %s11, 2
    %s18 = sadd.s32 %s11, 1
    %s19 = ssub.s32 %s11, %s18
    %p20 = scmp.eq.s32.totalorder %s19, 0
    %s22 = sadd.s32 %s21, 1
    %s23 = scalar_select %p20, %s21, %s22
    %p26 = pneg %p20
    %p27 = scmp.eq.s32.totalorder %s11, 1
    %p28 = por %p26, %p27
    %p29 = scmp.ne.s32.totalorder %s21, %s24
    %p30 = scmp.eq.s32.totalorder %s11, 0
    %p31 = por %p29, %p30
    %p32 = scmp.ne.s32.totalorder %s21, %s24
    %p33 = scmp.eq.s32.totalorder %s16, 1
    %p34 = por %p32, %p33
    %p35 = scmp.ne.s32.totalorder %s24, %s25
    %p36 = scmp.eq.s32.totalorder %s16, 0
    %p37 = por %p35, %p36
    %p38 = scmp.ne.s32.totalorder %s24, %s25
    %p39 = scmp.eq.s32.totalorder %s17, 1
    %p40 = por %p38, %p39
    %p42 = scmp.ne.s32.totalorder %s25, %s41
    %p43 = scmp.eq.s32.totalorder %s17, 0
    %p44 = por %p42, %p43
    %s46 = sadd.s32 %s45, 1
    %p49 = scmp.eq.s32.totalorder %s11, 1
    %p50 = scmp.ne.s32.totalorder %s45, %s47
    %p51 = scmp.eq.s32.totalorder %s11, 0
    %p52 = por %p50, %p51
    %p53 = scmp.ne.s32.totalorder %s45, %s47
    %p54 = scmp.eq.s32.totalorder %s16, 1
    %p55 = por %p53, %p54
    %p56 = scmp.ne.s32.totalorder %s47, %s48
    %p57 = scmp.eq.s32.totalorder %s16, 0
    %p58 = por %p56, %p57
    %p59 = scmp.ne.s32.totalorder %s47, %s48
    %p60 = scmp.eq.s32.totalorder %s17, 1
    %p61 = por %p59, %p60
    %p63 = scmp.ne.s32.totalorder %s48, %s62
    %p64 = scmp.eq.s32.totalorder %s17, 0
    %p65 = por %p63, %p64
    %s67 = sadd.s32 %s66, 1
    %p70 = scmp.eq.s32.totalorder %s11, 1
    %p71 = scmp.ne.s32.totalorder %s66, %s68
    %p72 = scmp.eq.s32.totalorder %s11, 0
    %p73 = por %p71, %p72
    %p74 = scmp.ne.s32.totalorder %s66, %s68
    %p75 = scmp.eq.s32.totalorder %s16, 1
    %p76 = por %p74, %p75
    %p77 = scmp.ne.s32.totalorder %s68, %s69
    %p78 = scmp.eq.s32.totalorder %s16, 0
    %p79 = por %p77, %p78
    %p80 = scmp.ne.s32.totalorder %s68, %s69
    %p81 = scmp.eq.s32.totalorder %s17, 1
    %p82 = por %p80, %p81
    %p84 = scmp.ne.s32.totalorder %s69, %s83
    %p85 = scmp.eq.s32.totalorder %s17, 0
    %p86 = por %p84, %p85
    %s88 = sadd.s32 %s87, 1
    %p91 = scmp.eq.s32.totalorder %s11, 1
    %p92 = scmp.ne.s32.totalorder %s87, %s89
    %p93 = scmp.eq.s32.totalorder %s11, 0
    %p94 = por %p92, %p93
    %p95 = scmp.ne.s32.totalorder %s87, %s89
    %p96 = scmp.eq.s32.totalorder %s16, 1
    %p97 = por %p95, %p96
    %p98 = scmp.ne.s32.totalorder %s89, %s90
    %p99 = scmp.eq.s32.totalorder %s16, 0
    %p100 = por %p98, %p99
    %p101 = scmp.ne.s32.totalorder %s89, %s90
    %p102 = scmp.eq.s32.totalorder %s17, 1
    %p103 = por %p101, %p102
    %p105 = scmp.ne.s32.totalorder %s90, %s104
    %p106 = scmp.eq.s32.totalorder %s17, 0
    %p107 = por %p105, %p106
    %s109 = sadd.s32 %s108, 1
    %p112 = scmp.eq.s32.totalorder %s11, 1
    %p113 = scmp.ne.s32.totalorder %s108, %s110
    %p114 = scmp.eq.s32.totalorder %s11, 0
    %p115 = por %p113, %p114
    %p116 = scmp.ne.s32.totalorder %s108, %s110
    %p117 = scmp.eq.s32.totalorder %s16, 1
    %p118 = por %p116, %p117
    %p119 = scmp.ne.s32.totalorder %s110, %s111
    %p120 = scmp.eq.s32.totalorder %s16, 0
    %p121 = por %p119, %p120
    %p122 = scmp.ne.s32.totalorder %s110, %s111
    %p123 = scmp.eq.s32.totalorder %s17, 1
    %p124 = por %p122, %p123
    %p126 = scmp.ne.s32.totalorder %s111, %s125
    %p127 = scmp.eq.s32.totalorder %s17, 0
    %p128 = por %p126, %p127
    %s129 = ssub.s32 %s11, %s18
    %p130 = scmp.eq.s32.totalorder %s129, 0
    %s132 = sadd.s32 %s131, 1
    %s133 = scalar_select %p130, %s131, %s132
    %p136 = pneg %p130
    %p137 = scmp.eq.s32.totalorder %s11, 1
    %p138 = por %p136, %p137
    %p139 = scmp.ne.s32.totalorder %s131, %s134
    %p140 = scmp.eq.s32.totalorder %s11, 0
    %p141 = por %p139, %p140
    %p142 = scmp.ne.s32.totalorder %s131, %s134
    %p143 = scmp.eq.s32.totalorder %s16, 1
    %p144 = por %p142, %p143
    %p145 = scmp.ne.s32.totalorder %s134, %s135
    %p146 = scmp.eq.s32.totalorder %s16, 0
    %p147 = por %p145, %p146
    %p148 = scmp.ne.s32.totalorder %s134, %s135
    %p149 = scmp.eq.s32.totalorder %s17, 1
    %p150 = por %p148, %p149
    %p152 = scmp.ne.s32.totalorder %s135, %s151
    %p153 = scmp.eq.s32.totalorder %s17, 0
    %p154 = por %p152, %p153
    %p155 = scmp.le.s32.totalorder 1, %s11
    %p156 = scmp.lt.s32.totalorder %s11, 3
    %p157 = pnand %p155, %p156
    %p158 = pneg %p157
    // Predicated region
    $region9: #{conv_block_forward.3} parent=5 // pred_check
      _
    $region10: #{conv_block_forward.3} parent=5 // pred_check_branch
      %160 = sbr.rel (%p157) target = $region12
    $region11: #{conv_block_forward.3} parent=5 // pred_region
      %s161 = ssub.s32 %s11, 1
      // Predicated region
      $region13: #{conv_block_forward.3} parent=11 // pred_check
        %p162 = pneg %p58
      $region14: #{conv_block_forward.3} parent=11 // pred_check_branch
        %164 = sbr.rel (%p162) target = $region16
      $region15: #{conv_block_forward.3} parent=11 // pred_region
        _
      $region16: #{conv_block_forward.3} parent=11 // pred_fallthru
        _
      // Predicated region
      $region17: #{conv_block_forward.3} parent=11 // pred_check
        %p165 = pneg %p79
      $region18: #{conv_block_forward.3} parent=11 // pred_check_branch
        %167 = sbr.rel (%p165) target = $region20
      $region19: #{conv_block_forward.3} parent=11 // pred_region
        _
      $region20: #{conv_block_forward.3} parent=11 // pred_fallthru
        _
      // Predicated region
      $region21: #{conv_block_forward.3} parent=11 // pred_check
        %p168 = pneg %p100
      $region22: #{conv_block_forward.3} parent=11 // pred_check_branch
        %170 = sbr.rel (%p168) target = $region24
      $region23: #{conv_block_forward.3} parent=11 // pred_region
        _
      $region24: #{conv_block_forward.3} parent=11 // pred_fallthru
        _
      // Predicated region
      $region25: #{conv_block_forward.3} parent=11 // pred_check
        %p171 = pneg %p121
      $region26: #{conv_block_forward.3} parent=11 // pred_check_branch
        %173 = sbr.rel (%p171) target = $region28
      $region27: #{conv_block_forward.3} parent=11 // pred_region
        _
      $region28: #{conv_block_forward.3} parent=11 // pred_fallthru
        _
    $region12: #{conv_block_forward.3} parent=5 // pred_fallthru
      _
    %p174 = scmp.lt.s32.totalorder %s11, 2
    // Predicated region
    $region29: #{conv_block_forward.3} parent=5 // pred_check
      %p175 = pneg %p174
    $region30: #{conv_block_forward.3} parent=5 // pred_check_branch
      %177 = sbr.rel (%p175) target = $region32
    $region31: #{conv_block_forward.3} parent=5 // pred_region
      // Predicated region
      $region33: #{conv_block_forward.3} parent=31 // pred_check
        %p178 = pneg %p31
      $region34: #{conv_block_forward.3} parent=31 // pred_check_branch
        %180 = sbr.rel (%p178) target = $region36
      $region35: #{conv_block_forward.3} parent=31 // pred_region
        %s181 = smul.u32 10, %s11
        %p182 = scmp.lt.s32.totalorder %s181, 19
        %s183 = scalar_select %p182, %s181, 19
        %s184 = smul.addr %s183, 4
        %s185 = scalar_lea.vmem %s0, %s184
        %s186 = smul.u32 10, %s11
      $region36: #{conv_block_forward.3} parent=31 // pred_fallthru
        _
    $region32: #{conv_block_forward.3} parent=5 // pred_fallthru
      _
    %p187 = scmp.le.s32.totalorder 1, %s11
    %p188 = scmp.lt.s32.totalorder %s11, 3
    %p189 = pnand %p187, %p188
    %p190 = pneg %p189
    // Predicated region
    $region37: #{conv_block_forward.3} parent=5 // pred_check
      _
    $region38: #{conv_block_forward.3} parent=5 // pred_check_branch
      %192 = sbr.rel (%p189) target = $region40
    $region39: #{conv_block_forward.3} parent=5 // pred_region
      %s193 = ssub.s32 %s11, 1
      %s194 = smul.u32 10, %s16
      %p195 = scmp.lt.s32.totalorder %s194, 19
      %s196 = scalar_select %p195, %s194, 19
      %s197 = smul.addr %s196, 4
      %s198 = scalar_lea.vmem %s0, %s197
      %p199 = pneg %p37
      %p200 = pneg %p34
      %p201 = pneg %p58
      %p202 = pneg %p55
      %p203 = pneg %p79
      %p204 = pneg %p76
      %p205 = pneg %p100
      %p206 = pneg %p97
      %p207 = pneg %p121
      %p208 = pneg %p118
      %p209 = pneg %p147
      %p210 = pneg %p144
      %s211 = smul.u32 10, %s16
      %p212 = scmp.lt.s32.totalorder %s211, 19
      %s213 = scalar_select %p212, %s211, 19
      %s214 = smul.addr %s213, 4
      %s215 = scalar_lea.vmem %s5, %s214
      %s216 = smul.u32 10, %s16
      %p217 = scmp.lt.s32.totalorder %s216, 19
      %s218 = scalar_select %p217, %s216, 19
      %s219 = smul.addr %s218, 4
      %s220 = scalar_lea.vmem %s0, %s219
      %s221 = smul.u32 10, %s16
      %s222 = smul.u32 10, %s16
      %p223 = scmp.lt.s32.totalorder %s222, 19
      %s224 = scalar_select %p223, %s222, 19
      %s225 = smul.addr %s224, 4
      %s226 = scalar_lea.vmem %s5, %s225
      %s227 = smul.u32 10, %s16
      %v228 = vld [vmem:[%s1] sm:$0xff]
      %v229 = vld [vmem:[%s1 + $0x8] sm:$0xff]
      %v230 = vadd.f32 %v228, %v229
      %v231 = vrot.slane %v230, 4
      %v232 = vadd.f32 %v230, %v231
      %v233 = vrot.slane %v232, 2
      %v234 = vadd.f32 %v232, %v233
      %v235 = vrot.slane %v234, 1
      %v236 = vadd.f32 %v234, %v235
      %v237 = vld [vmem:[%s2] sm:$0xff]
      %v238 = vld [vmem:[%s2 + $0x8] sm:$0xff]
      %v239 = vadd.f32 %v237, %v238
      %v240 = vrot.slane %v239, 4
      %v241 = vadd.f32 %v239, %v240
      %v242 = vrot.slane %v241, 2
      %v243 = vadd.f32 %v241, %v242
      %v244 = vrot.slane %v243, 1
      %v245 = vadd.f32 %v243, %v244
      %v246 = vmul.f32 %v236, 0.0078125
      %v247 = vmul.f32 %v245, 0.0078125
      %v248 = vmul.f32 %v246, %v246
      %v249 = vsub.f32 %v247, %v248
      %v250 = vmax.f32 %v249, 0.0
      %v251 = vld [vmem:[%s3] sm:$0x1]
      %v252 = vadd.f32 %v250, 1e-05
      %v253 = vrsqrt.pop %v252
      %v254 = vmul.f32 %v251, %v253
      %v255 = vld [vmem:[%s4] sm:$0x1]
      %v256 = vmul.f32 %v246, %v254
      %v257 = vsub.f32 %v255, %v256
      %v258 = vld [vmem:[%s220] sm:$0xf]
      %v259 = vld [vmem:[%s220 + $0x4] sm:$0xf]
      %v260 = vld [vmem:[%s220 + $0x8] sm:$0xf]
      %v261 = vld [vmem:[%s220 + $0xc] sm:$0xf]
      %v262 = vld [vmem:[%s220 + $0x10] sm:$0xf]
      %v263 = vld [vmem:[%s220 + $0x14] sm:$0xf]
      %v264 = vld [vmem:[%s220 + $0x18] sm:$0xf]
      %v265 = vld [vmem:[%s220 + $0x1c] sm:$0xf]
      %v266 = vld [vmem:[%s220 + $0x20] sm:$0xf]
      %v267 = vld [vmem:[%s220 + $0x24] sm:$0xf]
      %v268 = vunpack.c.l.bf16 %v258
      %v269 = vunpack.c.l.bf16 %v259
      %v270 = vunpack.c.l.bf16 %v260
      %v271 = vunpack.c.l.bf16 %v261
      %v272 = vunpack.c.l.bf16 %v262
      %v273 = vunpack.c.l.bf16 %v263
      %v274 = vunpack.c.l.bf16 %v264
      %v275 = vunpack.c.l.bf16 %v265
      %v276 = vunpack.c.l.bf16 %v266
      %v277 = vunpack.c.l.bf16 %v267
      %v279 = vlaneseq
      %v280 = vshrl.u32 %v279, 7
      %v281 = vsub.s32 0, %v280
      %v282 = vrot.slane %v254, %v281
      %v284 = vmul.f32 %v268, %v282
      %v285 = vmul.f32 %v269, %v282
      %v286 = vmul.f32 %v270, %v282
      %v287 = vmul.f32 %v271, %v282
      %v288 = vmul.f32 %v272, %v282
      %v289 = vmul.f32 %v273, %v282
      %v290 = vmul.f32 %v274, %v282
      %v291 = vmul.f32 %v275, %v282
      %v292 = vmul.f32 %v276, %v282
      %v293 = vmul.f32 %v277, %v282
      %v295 = vlaneseq
      %v296 = vshrl.u32 %v295, 7
      %v297 = vsub.s32 0, %v296
      %v298 = vrot.slane %v257, %v297
      %v300 = vadd.f32 %v284, %v298
      %v301 = vadd.f32 %v285, %v298
      %v302 = vadd.f32 %v286, %v298
      %v303 = vadd.f32 %v287, %v298
      %v304 = vadd.f32 %v288, %v298
      %v305 = vadd.f32 %v289, %v298
      %v306 = vadd.f32 %v290, %v298
      %v307 = vadd.f32 %v291, %v298
      %v308 = vadd.f32 %v292, %v298
      %v309 = vadd.f32 %v293, %v298
      %v310 = vmax.f32 %v300, 0.0
      %v311 = vmax.f32 %v301, 0.0
      %v312 = vmax.f32 %v302, 0.0
      %v313 = vmax.f32 %v303, 0.0
      %v314 = vmax.f32 %v304, 0.0
      %v315 = vmax.f32 %v305, 0.0
      %v316 = vmax.f32 %v306, 0.0
      %v317 = vmax.f32 %v307, 0.0
      %v318 = vmax.f32 %v308, 0.0
      %v319 = vmax.f32 %v309, 0.0
      %v320 = vpack.c.bf16 %v311, %v310
      %v321 = vpack.c.bf16 %v313, %v312
      %v322 = vpack.c.bf16 %v315, %v314
      %v323 = vpack.c.bf16 %v317, %v316
      %v324 = vpack.c.bf16 %v319, %v318
      %v330 = vunpack.c.l.b16 %v320
      %v331 = vunpack.c.h.b16 %v320
      %v332 = vunpack.c.l.b16 %v321
      %v333 = vunpack.c.h.b16 %v321
      %v334 = vunpack.c.l.b16 %v322
      %v335 = vunpack.c.h.b16 %v322
      %v336 = vunpack.c.l.b16 %v323
      %v337 = vunpack.c.h.b16 %v323
      %v338 = vunpack.c.l.b16 %v324
      %v339 = vunpack.c.h.b16 %v324
      %v340 = vpack.c.b16 %v330, %v330
      %v341 = vpack.c.b16 %v331, %v331
      %v342 = vpack.c.b16 %v332, %v332
      %v343 = vpack.c.b16 %v333, %v333
      %v344 = vpack.c.b16 %v334, %v334
      %v345 = vpack.c.b16 %v335, %v335
      %v346 = vpack.c.b16 %v336, %v336
      %v347 = vpack.c.b16 %v337, %v337
      %v348 = vpack.c.b16 %v338, %v338
      %v349 = vpack.c.b16 %v339, %v339
      %360 = vst [vmem:[%s226] sm:$0xf] %v340
      %361 = vst [vmem:[%s226 + $0x4] sm:$0xf] %v341
      %362 = vst [vmem:[%s226 + $0x8] sm:$0xf] %v342
      %363 = vst [vmem:[%s226 + $0xc] sm:$0xf] %v343
      %364 = vst [vmem:[%s226 + $0x10] sm:$0xf] %v344
      %365 = vst [vmem:[%s226 + $0x14] sm:$0xf] %v345
      %366 = vst [vmem:[%s226 + $0x18] sm:$0xf] %v346
      %367 = vst [vmem:[%s226 + $0x1c] sm:$0xf] %v347
      %368 = vst [vmem:[%s226 + $0x20] sm:$0xf] %v348
      %369 = vst [vmem:[%s226 + $0x24] sm:$0xf] %v349
      %s370 = smul.u32 10, %s16
      %p371 = scmp.lt.s32.totalorder %s370, 19
      %s372 = scalar_select %p371, %s370, 19
      %s373 = smul.addr %s372, 4
      %s374 = scalar_lea.vmem %s5, %s373
      // Predicated region
      $region41: #{conv_block_forward.3} parent=39 // pred_check
        %p375 = pneg %p144
      $region42: #{conv_block_forward.3} parent=39 // pred_check_branch
        %377 = sbr.rel (%p375) target = $region44
      $region43: #{conv_block_forward.3} parent=39 // pred_region
        %s378 = smul.u32 10, %s16
      $region44: #{conv_block_forward.3} parent=39 // pred_fallthru
        _
    $region40: #{conv_block_forward.3} parent=5 // pred_fallthru
      _
    %p379 = scmp.le.s32.totalorder 2, %s11
    // Predicated region
    $region45: #{conv_block_forward.3} parent=5 // pred_check
      %p380 = pneg %p379
    $region46: #{conv_block_forward.3} parent=5 // pred_check_branch
      %382 = sbr.rel (%p380) target = $region48
    $region47: #{conv_block_forward.3} parent=5 // pred_region
      %s383 = ssub.s32 %s11, 2
      // Predicated region
      $region49: #{conv_block_forward.3} parent=47 // pred_check
        %p384 = pneg %p150
      $region50: #{conv_block_forward.3} parent=47 // pred_check_branch
        %386 = sbr.rel (%p384) target = $region52
      $region51: #{conv_block_forward.3} parent=47 // pred_region
        %s387 = smul.u32 10, %s17
        %p388 = scmp.lt.s32.totalorder %s387, 19
        %s389 = scalar_select %p388, %s387, 19
        %s390 = smul.addr %s389, 4
        %s391 = scalar_lea.vmem %s5, %s390
      $region52: #{conv_block_forward.3} parent=47 // pred_fallthru
        _
    $region48: #{conv_block_forward.3} parent=5 // pred_fallthru
      _
  $region6: #{conv_block_forward.3} parent=0 // loop_footer
    %s15 = sadd.s32 1, %s11
  $region7: #{conv_block_forward.3} parent=0 // loop_footer_branch
    %10 = sbr.rel target = $region3
  $region8: #{conv_block_forward.3} parent=0 // loop_exit
    _

// kernel: conv_block_forward.2
$region0: #{conv_block_forward.2}
  #allocation0 [shape = 'u32[]', space=smem, size = 0x4, offset = 0x4, fixed_abs, tag = 'smem constant byte address 0x4 - core index']
  #allocation1 [shape = 'u32[144,128]{1,0:T(1,128)}', space=vmem, size = 0x12000, scoped, tag = 'internal scratch']
  %s0 = inlined_call_operand.vmem [shape: bf16[192,16], index: 0, kind: input, shape index: {}]
  %s1 = inlined_call_operand.vmem [shape: bf16[4,16,128], index: 1, kind: input, shape index: {}]
  %s2 = inlined_call_operand.vmem [shape: f32[80,1], index: 2, kind: input, shape index: {}]
  %s3 = inlined_call_operand.vmem [shape: bf16[160,128], index: 3, kind: output, shape index: {0}]
  %s4 = inlined_call_operand.vmem [shape: f32[16,128], index: 4, kind: output, shape index: {1}]
  %s5 = inlined_call_operand.vmem [shape: f32[16,128], index: 5, kind: output, shape index: {2}]
  %6 = xla_tuple %s3, %s4, %s5
  %s7 = sld [smem:[#allocation0]]
  $region61: #{conv_block_forward.2} parent=0
    _
  %s9 = ssub.s32 1, %s7
  %s10 = scalar_select 0, %s9, %s7
  loop: start=0, step=1, limit=4
  $region2: #{conv_block_forward.2} parent=0 // loop_pre_header
    _
  $region3: #{conv_block_forward.2} parent=0 // loop_header
    %s12 = sphi 0, %s16
    %p13 = scmp.ge.s32.totalorder %s12, 4
    %s22 = sphi 0, %s24
    %s25 = sphi 0, %s22
    %s26 = sphi 0, %s25
    %s42 = sphi 0, %s26
    %s46 = sphi 0, %s46
    %s48 = sphi 0, %s46
    %s49 = sphi 0, %s48
    %s63 = sphi 0, %s49
    %s67 = sphi 0, %s67
    %s69 = sphi 0, %s67
    %s70 = sphi 0, %s69
    %s84 = sphi 0, %s70
    %s90 = sphi 0, %s92
    %s93 = sphi 0, %s90
    %s94 = sphi 0, %s93
    %s110 = sphi 0, %s94
    %s116 = sphi 0, %s118
    %s119 = sphi 0, %s116
    %s120 = sphi 0, %s119
    %s136 = sphi 0, %s120
    %s142 = sphi 0, %s144
    %s145 = sphi 0, %s142
    %s146 = sphi 0, %s145
    %s162 = sphi 0, %s146
  $region4: #{conv_block_forward.2} parent=0 // loop_header_branch
    %15 = sbr.rel (%p13) target = $region8
  $region5: #{conv_block_forward.2} parent=0 // loop_body
    %s17 = ssub.s32 %s12, 1
    %s18 = ssub.s32 %s12, 2
    %s19 = sadd.s32 %s12, 1
    %s20 = ssub.s32 %s12, %s19
    %p21 = scmp.eq.s32.totalorder %s20, 0
    %s23 = sadd.s32 %s22, 1
    %s24 = scalar_select %p21, %s22, %s23
    %p27 = pneg %p21
    %p28 = scmp.eq.s32.totalorder %s12, 1
    %p29 = por %p27, %p28
    %p30 = scmp.ne.s32.totalorder %s22, %s25
    %p31 = scmp.eq.s32.totalorder %s12, 0
    %p32 = por %p30, %p31
    %p33 = scmp.ne.s32.totalorder %s22, %s25
    %p34 = scmp.eq.s32.totalorder %s17, 1
    %p35 = por %p33, %p34
    %p36 = scmp.ne.s32.totalorder %s25, %s26
    %p37 = scmp.eq.s32.totalorder %s17, 0
    %p38 = por %p36, %p37
    %p39 = scmp.ne.s32.totalorder %s25, %s26
    %p40 = scmp.eq.s32.totalorder %s18, 1
    %p41 = por %p39, %p40
    %p43 = scmp.ne.s32.totalorder %s26, %s42
    %p44 = scmp.eq.s32.totalorder %s18, 0
    %p45 = por %p43, %p44
    %s47 = sadd.s32 %s46, 1
    %p50 = scmp.eq.s32.totalorder %s12, 1
    %p51 = scmp.ne.s32.totalorder %s46, %s48
    %p52 = scmp.eq.s32.totalorder %s12, 0
    %p53 = por %p51, %p52
    %p54 = scmp.ne.s32.totalorder %s46, %s48
    %p55 = scmp.eq.s32.totalorder %s17, 1
    %p56 = por %p54, %p55
    %p57 = scmp.ne.s32.totalorder %s48, %s49
    %p58 = scmp.eq.s32.totalorder %s17, 0
    %p59 = por %p57, %p58
    %p60 = scmp.ne.s32.totalorder %s48, %s49
    %p61 = scmp.eq.s32.totalorder %s18, 1
    %p62 = por %p60, %p61
    %p64 = scmp.ne.s32.totalorder %s49, %s63
    %p65 = scmp.eq.s32.totalorder %s18, 0
    %p66 = por %p64, %p65
    %s68 = sadd.s32 %s67, 1
    %p71 = scmp.eq.s32.totalorder %s12, 1
    %p72 = scmp.ne.s32.totalorder %s67, %s69
    %p73 = scmp.eq.s32.totalorder %s12, 0
    %p74 = por %p72, %p73
    %p75 = scmp.ne.s32.totalorder %s67, %s69
    %p76 = scmp.eq.s32.totalorder %s17, 1
    %p77 = por %p75, %p76
    %p78 = scmp.ne.s32.totalorder %s69, %s70
    %p79 = scmp.eq.s32.totalorder %s17, 0
    %p80 = por %p78, %p79
    %p81 = scmp.ne.s32.totalorder %s69, %s70
    %p82 = scmp.eq.s32.totalorder %s18, 1
    %p83 = por %p81, %p82
    %p85 = scmp.ne.s32.totalorder %s70, %s84
    %p86 = scmp.eq.s32.totalorder %s18, 0
    %p87 = por %p85, %p86
    %s88 = ssub.s32 %s12, %s19
    %p89 = scmp.eq.s32.totalorder %s88, 0
    %s91 = sadd.s32 %s90, 1
    %s92 = scalar_select %p89, %s90, %s91
    %p95 = pneg %p89
    %p96 = scmp.eq.s32.totalorder %s12, 1
    %p97 = por %p95, %p96
    %p98 = scmp.ne.s32.totalorder %s90, %s93
    %p99 = scmp.eq.s32.totalorder %s12, 0
    %p100 = por %p98, %p99
    %p101 = scmp.ne.s32.totalorder %s90, %s93
    %p102 = scmp.eq.s32.totalorder %s17, 1
    %p103 = por %p101, %p102
    %p104 = scmp.ne.s32.totalorder %s93, %s94
    %p105 = scmp.eq.s32.totalorder %s17, 0
    %p106 = por %p104, %p105
    %p107 = scmp.ne.s32.totalorder %s93, %s94
    %p108 = scmp.eq.s32.totalorder %s18, 1
    %p109 = por %p107, %p108
    %p111 = scmp.ne.s32.totalorder %s94, %s110
    %p112 = scmp.eq.s32.totalorder %s18, 0
    %p113 = por %p111, %p112
    %s114 = ssub.s32 %s12, %s19
    %p115 = scmp.eq.s32.totalorder %s114, 0
    %s117 = sadd.s32 %s116, 1
    %s118 = scalar_select %p115, %s116, %s117
    %p121 = pneg %p115
    %p122 = scmp.eq.s32.totalorder %s12, 1
    %p123 = por %p121, %p122
    %p124 = scmp.ne.s32.totalorder %s116, %s119
    %p125 = scmp.eq.s32.totalorder %s12, 0
    %p126 = por %p124, %p125
    %p127 = scmp.ne.s32.totalorder %s116, %s119
    %p128 = scmp.eq.s32.totalorder %s17, 1
    %p129 = por %p127, %p128
    %p130 = scmp.ne.s32.totalorder %s119, %s120
    %p131 = scmp.eq.s32.totalorder %s17, 0
    %p132 = por %p130, %p131
    %p133 = scmp.ne.s32.totalorder %s119, %s120
    %p134 = scmp.eq.s32.totalorder %s18, 1
    %p135 = por %p133, %p134
    %p137 = scmp.ne.s32.totalorder %s120, %s136
    %p138 = scmp.eq.s32.totalorder %s18, 0
    %p139 = por %p137, %p138
    %s140 = ssub.s32 %s12, %s19
    %p141 = scmp.eq.s32.totalorder %s140, 0
    %s143 = sadd.s32 %s142, 1
    %s144 = scalar_select %p141, %s142, %s143
    %p147 = pneg %p141
    %p148 = scmp.eq.s32.totalorder %s12, 1
    %p149 = por %p147, %p148
    %p150 = scmp.ne.s32.totalorder %s142, %s145
    %p151 = scmp.eq.s32.totalorder %s12, 0
    %p152 = por %p150, %p151
    %p153 = scmp.ne.s32.totalorder %s142, %s145
    %p154 = scmp.eq.s32.totalorder %s17, 1
    %p155 = por %p153, %p154
    %p156 = scmp.ne.s32.totalorder %s145, %s146
    %p157 = scmp.eq.s32.totalorder %s17, 0
    %p158 = por %p156, %p157
    %p159 = scmp.ne.s32.totalorder %s145, %s146
    %p160 = scmp.eq.s32.totalorder %s18, 1
    %p161 = por %p159, %p160
    %p163 = scmp.ne.s32.totalorder %s146, %s162
    %p164 = scmp.eq.s32.totalorder %s18, 0
    %p165 = por %p163, %p164
    %p166 = scmp.le.s32.totalorder 1, %s12
    %p167 = scmp.lt.s32.totalorder %s12, 3
    %p168 = pnand %p166, %p167
    %p169 = pneg %p168
    // Predicated region
    $region9: #{conv_block_forward.2} parent=5 // pred_check
      _
    $region10: #{conv_block_forward.2} parent=5 // pred_check_branch
      %171 = sbr.rel (%p168) target = $region12
    $region11: #{conv_block_forward.2} parent=5 // pred_region
      %s172 = ssub.s32 %s12, 1
      // Predicated region
      $region13: #{conv_block_forward.2} parent=11 // pred_check
        %p173 = pneg %p59
      $region14: #{conv_block_forward.2} parent=11 // pred_check_branch
        %175 = sbr.rel (%p173) target = $region16
      $region15: #{conv_block_forward.2} parent=11 // pred_region
        _
      $region16: #{conv_block_forward.2} parent=11 // pred_fallthru
        _
      // Predicated region
      $region17: #{conv_block_forward.2} parent=11 // pred_check
        %p176 = pneg %p80
      $region18: #{conv_block_forward.2} parent=11 // pred_check_branch
        %178 = sbr.rel (%p176) target = $region20
      $region19: #{conv_block_forward.2} parent=11 // pred_region
        _
      $region20: #{conv_block_forward.2} parent=11 // pred_fallthru
        _
    $region12: #{conv_block_forward.2} parent=5 // pred_fallthru
      _
    %p179 = scmp.lt.s32.totalorder %s12, 2
    // Predicated region
    $region21: #{conv_block_forward.2} parent=5 // pred_check
      %p180 = pneg %p179
    $region22: #{conv_block_forward.2} parent=5 // pred_check_branch
      %182 = sbr.rel (%p180) target = $region24
    $region23: #{conv_block_forward.2} parent=5 // pred_region
      // Predicated region
      $region25: #{conv_block_forward.2} parent=23 // pred_check
        %p183 = pneg %p32
      $region26: #{conv_block_forward.2} parent=23 // pred_check_branch
        %185 = sbr.rel (%p183) target = $region28
      $region27: #{conv_block_forward.2} parent=23 // pred_region
        %s186 = smul.u32 12, %s12
        %p187 = scmp.lt.s32.totalorder %s186, 23
        %s188 = scalar_select %p187, %s186, 23
        %s189 = smul.addr %s188, 4
        %s190 = scalar_lea.vmem %s0, %s189
        %s191 = smul.u32 12, %s12
      $region28: #{conv_block_forward.2} parent=23 // pred_fallthru
        _
    $region24: #{conv_block_forward.2} parent=5 // pred_fallthru
      _
    %p192 = scmp.le.s32.totalorder 1, %s12
    %p193 = scmp.lt.s32.totalorder %s12, 3
    %p194 = pnand %p192, %p193
    %p195 = pneg %p194
    // Predicated region
    $region29: #{conv_block_forward.2} parent=5 // pred_check
      _
    $region30: #{conv_block_forward.2} parent=5 // pred_check_branch
      %197 = sbr.rel (%p194) target = $region32
    $region31: #{conv_block_forward.2} parent=5 // pred_region
      %s198 = ssub.s32 %s12, 1
      %s199 = smul.u32 12, %s17
      %p200 = scmp.lt.s32.totalorder %s199, 23
      %s201 = scalar_select %p200, %s199, 23
      %s202 = smul.addr %s201, 4
      %s203 = scalar_lea.vmem %s0, %s202
      %p204 = pneg %p38
      %p205 = pneg %p35
      %p206 = pneg %p59
      %p207 = pneg %p56
      %p208 = pneg %p80
      %p209 = pneg %p77
      %p210 = pneg %p106
      %p211 = pneg %p103
      %s212 = smul.u32 10, %s17
      %p213 = scmp.lt.s32.totalorder %s212, 19
      %s214 = scalar_select %p213, %s212, 19
      %s215 = smul.addr %s214, 4
      %s216 = scalar_lea.vmem %s3, %s215
      %p217 = pneg %p132
      %p218 = pneg %p129
      %p219 = scmp.lt.s32.totalorder %s17, 1
      %s220 = scalar_select %p219, %s17, 1
      %s221 = smul.addr %s220, 8
      %s222 = scalar_lea.vmem %s4, %s221
      %p223 = pneg %p158
      %p224 = pneg %p155
      %p225 = scmp.lt.s32.totalorder %s17, 1
      %s226 = scalar_select %p225, %s17, 1
      %s227 = smul.addr %s226, 8
      %s228 = scalar_lea.vmem %s5, %s227
      %s229 = smul.u32 12, %s17
      %p230 = scmp.lt.s32.totalorder %s229, 23
      %s231 = scalar_select %p230, %s229, 23
      %s232 = smul.addr %s231, 4
      %s233 = scalar_lea.vmem %s0, %s232
      %s234 = smul.u32 12, %s17
      %s235 = smul.u32 10, %s17
      %p236 = scmp.lt.s32.totalorder %s235, 19
      %s237 = scalar_select %p236, %s235, 19
      %s238 = smul.addr %s237, 4
      %s239 = scalar_lea.vmem %s3, %s238
      %s240 = smul.u32 10, %s17
      %p241 = scmp.lt.s32.totalorder %s17, 1
      %s242 = scalar_select %p241, %s17, 1
      %s243 = smul.addr %s242, 8
      %s244 = scalar_lea.vmem %s4, %s243
      %p245 = scmp.lt.s32.totalorder %s17, 1
      %s246 = scalar_select %p245, %s17, 1
      %s247 = smul.addr %s246, 8
      %s248 = scalar_lea.vmem %s5, %s247
      %v250 = vld [vmem:[%s233] sm:$0xf]
      %v251 = vld [vmem:[%s233 + $0x4] sm:$0xf]
      %v252 = vld [vmem:[%s233 + $0x8] sm:$0xf]
      %v253 = vld [vmem:[%s233 + $0xc] sm:$0xf]
      %v254 = vld [vmem:[%s233 + $0x10] sm:$0xf]
      %v255 = vld [vmem:[%s233 + $0x14] sm:$0xf]
      %v256 = vld [vmem:[%s233 + $0x18] sm:$0xf]
      %v257 = vld [vmem:[%s233 + $0x1c] sm:$0xf]
      %v258 = vld [vmem:[%s233 + $0x20] sm:$0xf]
      %v259 = vld [vmem:[%s233 + $0x24] sm:$0xf]
      %v260 = vld [vmem:[%s1] sm:$0xf]
      %v261 = vld [vmem:[%s1 + $0x4] sm:$0xf]
      %v262 = vld [vmem:[%s233 + $0x28] sm:$0x1]
      %s263 = scalar_lea.vmem %s1, 8
      %v264 = vld [vmem:[%s263] sm:$0xf]
      %v265 = vld [vmem:[%s263 + $0x4] sm:$0xf]
      %v277 = vunpack.c.l.b16 %v250
      %v278 = vunpack.c.l.b16 %v251
      %v279 = vunpack.c.l.b16 %v252
      %v280 = vunpack.c.l.b16 %v253
      %v281 = vunpack.c.l.b16 %v254
      %v282 = vunpack.c.l.b16 %v255
      %v283 = vunpack.c.l.b16 %v256
      %v284 = vunpack.c.l.b16 %v257
      %v285 = vunpack.c.l.b16 %v258
      %v286 = vunpack.c.l.b16 %v259
      %v287 = vunpack.c.l.b16 %v262
      %v288 = vpack.c.b16 %v278, %v277
      %v289 = vpack.c.b16 %v280, %v279
      %v290 = vpack.c.b16 %v282, %v281
      %v291 = vpack.c.b16 %v284, %v283
      %v292 = vpack.c.b16 %v286, %v285
      %v293 = vpack.c.b16 %v287, %v287
      %vm294 = vsmask.f32 7424
      %v296 = vshrl.u32 %v288, 16
      %v298 = vshll.u32 %v288, 16
      %v300 = vrot.slane %v298, 1
      %v301 = vor.u32 %v296, %v300
      %v303 = vshll.u32 %v289, 16
      %v305 = vrot.slane %v303, 1
      %v306 = vsel %vm294, %v301, %v305
      %v307 = vshrl.u32 %v289, 16
      %v309 = vor.u32 %v307, %v305
      %v311 = vshll.u32 %v290, 16
      %v313 = vrot.slane %v311, 1
      %v314 = vsel %vm294, %v309, %v313
      %v315 = vshrl.u32 %v290, 16
      %v317 = vor.u32 %v315, %v313
      %v319 = vshll.u32 %v291, 16
      %v321 = vrot.slane %v319, 1
      %v322 = vsel %vm294, %v317, %v321
      %v323 = vshrl.u32 %v291, 16
      %v325 = vor.u32 %v323, %v321
      %v327 = vshll.u32 %v292, 16
      %v329 = vrot.slane %v327, 1
      %v330 = vsel %vm294, %v325, %v329
      %v331 = vshrl.u32 %v292, 16
      %v333 = vor.u32 %v331, %v329
      %v335 = vshll.u32 %v293, 16
      %v337 = vrot.slane %v335, 1
      %v338 = vsel %vm294, %v333, %v337
      %v341 = vunpack.c.l.b16 %v264
      %v342 = vunpack.c.l.b16 %v265
      %v343 = vpack.c.b16 %v342, %v341
      %vm345 = vcmask 130048
      %v347 = vsel %vm345, %v306, 0
      %v350 = vsel %vm345, %v314, 0
      %v353 = vsel %vm345, %v322, 0
      %v356 = vsel %vm345, %v330, 0
      %v359 = vsel %vm345, %v338, 0
      %361 = vmatprep.subr.bf16.mxu0 0
      %362 = vmatpush1.bf16.msra.mxu0 0
      %363 = vmatprep.subr.bf16.mxu0 0
      %364 = vmatpush1.bf16.msra.mxu0 0
      %365 = vmatprep.subr.bf16.mxu0 0
      %366 = vmatpush1.bf16.msra.mxu0 0
      %367 = vmatprep.subr.bf16.mxu0 0
      %368 = vmatpush1.bf16.msra.mxu0 0
      %369 = vmatprep.subr.bf16.mxu0 0
      %370 = vmatpush1.bf16.msra.mxu0 0
      %371 = vmatprep.subr.bf16.mxu0 0
      %372 = vmatpush1.bf16.msra.mxu0 0
      %373 = vmatprep.subr.bf16.mxu0 0
      %374 = vmatpush1.bf16.msra.mxu0 0
      %375 = vmatprep.subr.bf16.mxu0 0
      %376 = vmatpush1.bf16.msra.mxu0 %v343
      %377 = vmatprep.subr.bf16.mxu0 0
      %378 = vmatpush2.bf16.msra.mxu0 0
      %379 = vmatprep.subr.bf16.mxu0 0
      %380 = vmatpush2.bf16.msra.mxu0 0
      %381 = vmatprep.subr.bf16.mxu0 0
      %382 = vmatpush2.bf16.msra.mxu0 0
      %383 = vmatprep.subr.bf16.mxu0 0
      %384 = vmatpush2.bf16.msra.mxu0 0
      %385 = vmatprep.subr.bf16.mxu0 0
      %386 = vmatpush2.bf16.msra.mxu0 0
      %387 = vmatprep.subr.bf16.mxu0 0
      %388 = vmatpush2.bf16.msra.mxu0 0
      %389 = vmatprep.subr.bf16.mxu0 0
      %390 = vmatpush2.bf16.msra.mxu0 0
      %391 = vmatprep.subr.bf16.mxu0 0
      %392 = vmatpush2.bf16.msra.mxu0 0
      %393 = vmatprep.mubr.bf16.mxu0 0
      %394 = vmatmul.mubr.bf16.gmra.mxu0 %v347
      %v395 = vpop.f32.mrf.mxu0
      %v396 = vadd.f32 0.0, %v395
      %v397 = vpop.f32.mrf.mxu0
      %v398 = vpop.f32.mrf.mxu0
      %v399 = vadd.f32 0.0, %v398
      %v400 = vpop.f32.mrf.mxu0
      %401 = vmatprep.mubr.bf16.mxu0 0
      %402 = vmatmul.mubr.bf16.gmra.mxu0 %v350
      %v403 = vpop.f32.mrf.mxu0
      %v404 = vadd.f32 0.0, %v403
      %v405 = vpop.f32.mrf.mxu0
      %v406 = vpop.f32.mrf.mxu0
      %v407 = vadd.f32 0.0, %v406
      %v408 = vpop.f32.mrf.mxu0
      %409 = vmatprep.mubr.bf16.mxu0 0
      %410 = vmatmul.mubr.bf16.gmra.mxu0 %v353
      %v411 = vpop.f32.mrf.mxu0
      %v412 = vadd.f32 0.0, %v411
      %v413 = vpop.f32.mrf.mxu0
      %v414 = vpop.f32.mrf.mxu0
      %v415 = vadd.f32 0.0, %v414
      %v416 = vpop.f32.mrf.mxu0
      %417 = vmatprep.mubr.bf16.mxu0 0
      %418 = vmatmul.mubr.bf16.gmra.mxu0 %v356
      %v419 = vpop.f32.mrf.mxu0
      %v420 = vadd.f32 0.0, %v419
      %v421 = vpop.f32.mrf.mxu0
      %v422 = vpop.f32.mrf.mxu0
      %v423 = vadd.f32 0.0, %v422
      %v424 = vpop.f32.mrf.mxu0
      %425 = vmatprep.mubr.bf16.mxu0 0
      %426 = vmatmul.mubr.bf16.gmra.mxu0 %v359
      %v427 = vpop.f32.mrf.mxu0
      %v428 = vadd.f32 0.0, %v427
      %v429 = vpop.f32.mrf.mxu0
      %v430 = vpop.f32.mrf.mxu0
      %v431 = vadd.f32 0.0, %v430
      %v432 = vpop.f32.mrf.mxu0
      %433 = vdwg.mxu0
      %v436 = vunpack.c.l.b16 %v260
      %v437 = vunpack.c.l.b16 %v261
      %v438 = vpack.c.b16 %v437, %v436
      %v440 = vsel %vm345, %v288, 0
      %v442 = vsel %vm345, %v289, 0
      %v444 = vsel %vm345, %v290, 0
      %v446 = vsel %vm345, %v291, 0
      %v448 = vsel %vm345, %v292, 0
      %450 = vmatprep.subr.bf16.mxu0 0
      %451 = vmatpush1.bf16.msra.mxu0 0
      %452 = vmatprep.subr.bf16.mxu0 0
      %453 = vmatpush1.bf16.msra.mxu0 0
      %454 = vmatprep.subr.bf16.mxu0 0
      %455 = vmatpush1.bf16.msra.mxu0 0
      %456 = vmatprep.subr.bf16.mxu0 0
      %457 = vmatpush1.bf16.msra.mxu0 0
      %458 = vmatprep.subr.bf16.mxu0 0
      %459 = vmatpush1.bf16.msra.mxu0 0
      %460 = vmatprep.subr.bf16.mxu0 0
      %461 = vmatpush1.bf16.msra.mxu0 0
      %462 = vmatprep.subr.bf16.mxu0 0
      %463 = vmatpush1.bf16.msra.mxu0 0
      %464 = vmatprep.subr.bf16.mxu0 0
      %465 = vmatpush1.bf16.msra.mxu0 %v438
      %466 = vmatprep.subr.bf16.mxu0 0
      %467 = vmatpush2.bf16.msra.mxu0 0
      %468 = vmatprep.subr.bf16.mxu0 0
      %469 = vmatpush2.bf16.msra.mxu0 0
      %470 = vmatprep.subr.bf16.mxu0 0
      %471 = vmatpush2.bf16.msra.mxu0 0
      %472 = vmatprep.subr.bf16.mxu0 0
      %473 = vmatpush2.bf16.msra.mxu0 0
      %474 = vmatprep.subr.bf16.mxu0 0
      %475 = vmatpush2.bf16.msra.mxu0 0
      %476 = vmatprep.subr.bf16.mxu0 0
      %477 = vmatpush2.bf16.msra.mxu0 0
      %478 = vmatprep.subr.bf16.mxu0 0
      %479 = vmatpush2.bf16.msra.mxu0 0
      %480 = vmatprep.subr.bf16.mxu0 0
      %481 = vmatpush2.bf16.msra.mxu0 0
      %482 = vmatprep.mubr.bf16.mxu0 0
      %483 = vmatmul.mubr.bf16.gmra.mxu0 %v440
      %v484 = vpop.f32.mrf.mxu0
      %v485 = vadd.f32 %v396, %v484
      %v486 = vpop.f32.mrf.mxu0
      %v487 = vpop.f32.mrf.mxu0
      %v488 = vadd.f32 %v399, %v487
      %v489 = vpop.f32.mrf.mxu0
      %490 = vmatprep.mubr.bf16.mxu0 0
      %491 = vmatmul.mubr.bf16.gmra.mxu0 %v442
      %v492 = vpop.f32.mrf.mxu0
      %v493 = vadd.f32 %v404, %v492
      %v494 = vpop.f32.mrf.mxu0
      %v495 = vpop.f32.mrf.mxu0
      %v496 = vadd.f32 %v407, %v495
      %v497 = vpop.f32.mrf.mxu0
      %498 = vmatprep.mubr.bf16.mxu0 0
      %499 = vmatmul.mubr.bf16.gmra.mxu0 %v444
      %v500 = vpop.f32.mrf.mxu0
      %v501 = vadd.f32 %v412, %v500
      %v502 = vpop.f32.mrf.mxu0
      %v503 = vpop.f32.mrf.mxu0
      %v504 = vadd.f32 %v415, %v503
      %v505 = vpop.f32.mrf.mxu0
      %506 = vmatprep.mubr.bf16.mxu0 0
      %507 = vmatmul.mubr.bf16.gmra.mxu0 %v446
      %v508 = vpop.f32.mrf.mxu0
      %v509 = vadd.f32 %v420, %v508
      %v510 = vpop.f32.mrf.mxu0
      %v511 = vpop.f32.mrf.mxu0
      %v512 = vadd.f32 %v423, %v511
      %v513 = vpop.f32.mrf.mxu0
      %514 = vmatprep.mubr.bf16.mxu0 0
      %515 = vmatmul.mubr.bf16.gmra.mxu0 %v448
      %v516 = vpop.f32.mrf.mxu0
      %v517 = vadd.f32 %v428, %v516
      %v518 = vpop.f32.mrf.mxu0
      %v519 = vpop.f32.mrf.mxu0
      %v520 = vadd.f32 %v431, %v519
      %v521 = vpop.f32.mrf.mxu0
      %522 = vdwg.mxu0
      %v523 = vld [vmem:[%s233 + $0x4] sm:$0xf]
      %v524 = vld [vmem:[%s233 + $0x8] sm:$0xf]
      %v525 = vld [vmem:[%s233 + $0xc] sm:$0xf]
      %v526 = vld [vmem:[%s233 + $0x10] sm:$0xf]
      %v527 = vld [vmem:[%s233 + $0x14] sm:$0xf]
      %v528 = vld [vmem:[%s233 + $0x18] sm:$0xf]
      %v529 = vld [vmem:[%s233 + $0x1c] sm:$0xf]
      %v530 = vld [vmem:[%s233 + $0x20] sm:$0xf]
      %v531 = vld [vmem:[%s233 + $0x24] sm:$0xf]
      %v532 = vld [vmem:[%s233 + $0x28] sm:$0xf]
      %v533 = vld [vmem:[%s233 + $0x2c] sm:$0x1]
      %s534 = scalar_lea.vmem %s1, 16
      %v535 = vld [vmem:[%s534] sm:$0xf]
      %v536 = vld [vmem:[%s534 + $0x4] sm:$0xf]
      %v548 = vunpack.c.l.b16 %v523
      %v549 = vunpack.c.l.b16 %v524
      %v550 = vunpack.c.l.b16 %v525
      %v551 = vunpack.c.l.b16 %v526
      %v552 = vunpack.c.l.b16 %v527
      %v553 = vunpack.c.l.b16 %v528
      %v554 = vunpack.c.l.b16 %v529
      %v555 = vunpack.c.l.b16 %v530
      %v556 = vunpack.c.l.b16 %v531
      %v557 = vunpack.c.l.b16 %v532
      %v558 = vunpack.c.l.b16 %v533
      %v559 = vpack.c.b16 %v549, %v548
      %v560 = vpack.c.b16 %v551, %v550
      %v561 = vpack.c.b16 %v553, %v552
      %v562 = vpack.c.b16 %v555, %v554
      %v563 = vpack.c.b16 %v557, %v556
      %v564 = vpack.c.b16 %v558, %v558
      %v566 = vshrl.u32 %v559, 16
      %v568 = vshll.u32 %v559, 16
      %v570 = vrot.slane %v568, 1
      %v571 = vor.u32 %v566, %v570
      %v573 = vshll.u32 %v560, 16
      %v575 = vrot.slane %v573, 1
      %v576 = vsel %vm294, %v571, %v575
      %v577 = vshrl.u32 %v560, 16
      %v579 = vor.u32 %v577, %v575
      %v581 = vshll.u32 %v561, 16
      %v583 = vrot.slane %v581, 1
      %v584 = vsel %vm294, %v579, %v583
      %v585 = vshrl.u32 %v561, 16
      %v587 = vor.u32 %v585, %v583
      %v589 = vshll.u32 %v562, 16
      %v591 = vrot.slane %v589, 1
      %v592 = vsel %vm294, %v587, %v591
      %v593 = vshrl.u32 %v562, 16
      %v595 = vor.u32 %v593, %v591
      %v597 = vshll.u32 %v563, 16
      %v599 = vrot.slane %v597, 1
      %v600 = vsel %vm294, %v595, %v599
      %v601 = vshrl.u32 %v563, 16
      %v603 = vor.u32 %v601, %v599
      %v605 = vshll.u32 %v564, 16
      %v607 = vrot.slane %v605, 1
      %v608 = vsel %vm294, %v603, %v607
      %v611 = vunpack.c.l.b16 %v535
      %v612 = vunpack.c.l.b16 %v536
      %v613 = vpack.c.b16 %v612, %v611
      %v616 = vsel %vm345, %v576, 0
      %v619 = vsel %vm345, %v584, 0
      %v622 = vsel %vm345, %v592, 0
      %v625 = vsel %vm345, %v600, 0
      %v628 = vsel %vm345, %v608, 0
      %630 = vmatprep.subr.bf16.mxu0 0
      %631 = vmatpush1.bf16.msra.mxu0 0
      %632 = vmatprep.subr.bf16.mxu0 0
      %633 = vmatpush1.bf16.msra.mxu0 0
      %634 = vmatprep.subr.bf16.mxu0 0
      %635 = vmatpush1.bf16.msra.mxu0 0
      %636 = vmatprep.subr.bf16.mxu0 0
      %637 = vmatpush1.bf16.msra.mxu0 0
      %638 = vmatprep.subr.bf16.mxu0 0
      %639 = vmatpush1.bf16.msra.mxu0 0
      %640 = vmatprep.subr.bf16.mxu0 0
      %641 = vmatpush1.bf16.msra.mxu0 0
      %642 = vmatprep.subr.bf16.mxu0 0
      %643 = vmatpush1.bf16.msra.mxu0 0
      %644 = vmatprep.subr.bf16.mxu0 0
      %645 = vmatpush1.bf16.msra.mxu0 %v613
      %646 = vmatprep.subr.bf16.mxu0 0
      %647 = vmatpush2.bf16.msra.mxu0 0
      %648 = vmatprep.subr.bf16.mxu0 0
      %649 = vmatpush2.bf16.msra.mxu0 0
      %650 = vmatprep.subr.bf16.mxu0 0
      %651 = vmatpush2.bf16.msra.mxu0 0
      %652 = vmatprep.subr.bf16.mxu0 0
      %653 = vmatpush2.bf16.msra.mxu0 0
      %654 = vmatprep.subr.bf16.mxu0 0
      %655 = vmatpush2.bf16.msra.mxu0 0
      %656 = vmatprep.subr.bf16.mxu0 0
      %657 = vmatpush2.bf16.msra.mxu0 0
      %658 = vmatprep.subr.bf16.mxu0 0
      %659 = vmatpush2.bf16.msra.mxu0 0
      %660 = vmatprep.subr.bf16.mxu0 0
      %661 = vmatpush2.bf16.msra.mxu0 0
      %662 = vmatprep.mubr.bf16.mxu0 0
      %663 = vmatmul.mubr.bf16.gmra.mxu0 %v616
      %v664 = vpop.f32.mrf.mxu0
      %v665 = vadd.f32 0.0, %v664
      %v666 = vpop.f32.mrf.mxu0
      %v667 = vpop.f32.mrf.mxu0
      %v668 = vadd.f32 0.0, %v667
      %v669 = vpop.f32.mrf.mxu0
      %670 = vmatprep.mubr.bf16.mxu0 0
      %671 = vmatmul.mubr.bf16.gmra.mxu0 %v619
      %v672 = vpop.f32.mrf.mxu0
      %v673 = vadd.f32 0.0, %v672
      %v674 = vpop.f32.mrf.mxu0
      %v675 = vpop.f32.mrf.mxu0
      %v676 = vadd.f32 0.0, %v675
      %v677 = vpop.f32.mrf.mxu0
      %678 = vmatprep.mubr.bf16.mxu0 0
      %679 = vmatmul.mubr.bf16.gmra.mxu0 %v622
      %v680 = vpop.f32.mrf.mxu0
      %v681 = vadd.f32 0.0, %v680
      %v682 = vpop.f32.mrf.mxu0
      %v683 = vpop.f32.mrf.mxu0
      %v684 = vadd.f32 0.0, %v683
      %v685 = vpop.f32.mrf.mxu0
      %686 = vmatprep.mubr.bf16.mxu0 0
      %687 = vmatmul.mubr.bf16.gmra.mxu0 %v625
      %v688 = vpop.f32.mrf.mxu0
      %v689 = vadd.f32 0.0, %v688
      %v690 = vpop.f32.mrf.mxu0
      %v691 = vpop.f32.mrf.mxu0
      %v692 = vadd.f32 0.0, %v691
      %v693 = vpop.f32.mrf.mxu0
      %694 = vmatprep.mubr.bf16.mxu0 0
      %695 = vmatmul.mubr.bf16.gmra.mxu0 %v628
      %v696 = vpop.f32.mrf.mxu0
      %v697 = vadd.f32 0.0, %v696
      %v698 = vpop.f32.mrf.mxu0
      %v699 = vpop.f32.mrf.mxu0
      %v700 = vadd.f32 0.0, %v699
      %v701 = vpop.f32.mrf.mxu0
      %702 = vdwg.mxu0
      %v703 = vadd.f32 %v485, %v665
      %v704 = vadd.f32 %v488, %v668
      %v705 = vadd.f32 %v493, %v673
      %v706 = vadd.f32 %v496, %v676
      %v707 = vadd.f32 %v501, %v681
      %v708 = vadd.f32 %v504, %v684
      %v709 = vadd.f32 %v509, %v689
      %v710 = vadd.f32 %v512, %v692
      %v711 = vadd.f32 %v517, %v697
      %v712 = vadd.f32 %v520, %v700
      %v713 = vld [vmem:[%s233 + $0x4] sm:$0xe]
      %s714 = scalar_lea.vmem %s1, 24
      %v715 = vld [vmem:[%s714] sm:$0xf]
      %v716 = vld [vmem:[%s714 + $0x4] sm:$0xf]
      %v718 = vunpack.c.l.b16 %v713
      %v719 = vpack.c.b16 %v549, %v718
      %vm720 = vcmask 1046528
      %v721 = vrot.slane %v719, 1
      %v722 = vrot.slane %v560, 1
      %v723 = vsel %vm720, %v721, %v722
      %v724 = vrot.slane %v561, 1
      %v725 = vsel %vm720, %v722, %v724
      %v726 = vrot.slane %v562, 1
      %v727 = vsel %vm720, %v724, %v726
      %v728 = vrot.slane %v563, 1
      %v729 = vsel %vm720, %v726, %v728
      %v730 = vrot.slane %v564, 1
      %v731 = vsel %vm720, %v728, %v730
      %v734 = vunpack.c.l.b16 %v715
      %v735 = vunpack.c.l.b16 %v716
      %v736 = vpack.c.b16 %v735, %v734
      %v739 = vsel %vm345, %v723, 0
      %v742 = vsel %vm345, %v725, 0
      %v745 = vsel %vm345, %v727, 0
      %v748 = vsel %vm345, %v729, 0
      %v751 = vsel %vm345, %v731, 0
      %753 = vmatprep.subr.bf16.mxu0 0
      %754 = vmatpush1.bf16.msra.mxu0 0
      %755 = vmatprep.subr.bf16.mxu0 0
      %756 = vmatpush1.bf16.msra.mxu0 0
      %757 = vmatprep.subr.bf16.mxu0 0
      %758 = vmatpush1.bf16.msra.mxu0 0
      %759 = vmatprep.subr.bf16.mxu0 0
      %760 = vmatpush1.bf16.msra.mxu0 0
      %761 = vmatprep.subr.bf16.mxu0 0
      %762 = vmatpush1.bf16.msra.mxu0 0
      %763 = vmatprep.subr.bf16.mxu0 0
      %764 = vmatpush1.bf16.msra.mxu0 0
      %765 = vmatprep.subr.bf16.mxu0 0
      %766 = vmatpush1.bf16.msra.mxu0 0
      %767 = vmatprep.subr.bf16.mxu0 0
      %768 = vmatpush1.bf16.msra.mxu0 %v736
      %769 = vmatprep.subr.bf16.mxu0 0
      %770 = vmatpush2.bf16.msra.mxu0 0
      %771 = vmatprep.subr.bf16.mxu0 0
      %772 = vmatpush2.bf16.msra.mxu0 0
      %773 = vmatprep.subr.bf16.mxu0 0
      %774 = vmatpush2.bf16.msra.mxu0 0
      %775 = vmatprep.subr.bf16.mxu0 0
      %776 = vmatpush2.bf16.msra.mxu0 0
      %777 = vmatprep.subr.bf16.mxu0 0
      %778 = vmatpush2.bf16.msra.mxu0 0
      %779 = vmatprep.subr.bf16.mxu0 0
      %780 = vmatpush2.bf16.msra.mxu0 0
      %781 = vmatprep.subr.bf16.mxu0 0
      %782 = vmatpush2.bf16.msra.mxu0 0
      %783 = vmatprep.subr.bf16.mxu0 0
      %784 = vmatpush2.bf16.msra.mxu0 0
      %785 = vmatprep.mubr.bf16.mxu0 0
      %786 = vmatmul.mubr.bf16.gmra.mxu0 %v739
      %v787 = vpop.f32.mrf.mxu0
      %v788 = vadd.f32 0.0, %v787
      %v789 = vpop.f32.mrf.mxu0
      %v790 = vpop.f32.mrf.mxu0
      %v791 = vadd.f32 0.0, %v790
      %v792 = vpop.f32.mrf.mxu0
      %793 = vmatprep.mubr.bf16.mxu0 0
      %794 = vmatmul.mubr.bf16.gmra.mxu0 %v742
      %v795 = vpop.f32.mrf.mxu0
      %v796 = vadd.f32 0.0, %v795
      %v797 = vpop.f32.mrf.mxu0
      %v798 = vpop.f32.mrf.mxu0
      %v799 = vadd.f32 0.0, %v798
      %v800 = vpop.f32.mrf.mxu0
      %801 = vmatprep.mubr.bf16.mxu0 0
      %802 = vmatmul.mubr.bf16.gmra.mxu0 %v745
      %v803 = vpop.f32.mrf.mxu0
      %v804 = vadd.f32 0.0, %v803
      %v805 = vpop.f32.mrf.mxu0
      %v806 = vpop.f32.mrf.mxu0
      %v807 = vadd.f32 0.0, %v806
      %v808 = vpop.f32.mrf.mxu0
      %809 = vmatprep.mubr.bf16.mxu0 0
      %810 = vmatmul.mubr.bf16.gmra.mxu0 %v748
      %v811 = vpop.f32.mrf.mxu0
      %v812 = vadd.f32 0.0, %v811
      %v813 = vpop.f32.mrf.mxu0
      %v814 = vpop.f32.mrf.mxu0
      %v815 = vadd.f32 0.0, %v814
      %v816 = vpop.f32.mrf.mxu0
      %817 = vmatprep.mubr.bf16.mxu0 0
      %818 = vmatmul.mubr.bf16.gmra.mxu0 %v751
      %v819 = vpop.f32.mrf.mxu0
      %v820 = vadd.f32 0.0, %v819
      %v821 = vpop.f32.mrf.mxu0
      %v822 = vpop.f32.mrf.mxu0
      %v823 = vadd.f32 0.0, %v822
      %v824 = vpop.f32.mrf.mxu0
      %825 = vdwg.mxu0
      %v826 = vadd.f32 %v703, %v788
      %v827 = vadd.f32 %v704, %v791
      %v828 = vadd.f32 %v705, %v796
      %v829 = vadd.f32 %v706, %v799
      %v830 = vadd.f32 %v707, %v804
      %v831 = vadd.f32 %v708, %v807
      %v832 = vadd.f32 %v709, %v812
      %v833 = vadd.f32 %v710, %v815
      %v834 = vadd.f32 %v711, %v820
      %v835 = vadd.f32 %v712, %v823
      %v836 = vld [vmem:[%s2] sm:$0xff]
      %v837 = vld [vmem:[%s2 + $0x8] sm:$0xff]
      %v838 = vld [vmem:[%s2 + $0x10] sm:$0xff]
      %v839 = vld [vmem:[%s2 + $0x18] sm:$0xff]
      %v840 = vld [vmem:[%s2 + $0x20] sm:$0xff]
      %v841 = vld [vmem:[%s2 + $0x28] sm:$0xff]
      %v842 = vld [vmem:[%s2 + $0x30] sm:$0xff]
      %v843 = vld [vmem:[%s2 + $0x38] sm:$0xff]
      %v844 = vld [vmem:[%s2 + $0x40] sm:$0xff]
      %v845 = vld [vmem:[%s2 + $0x48] sm:$0xff]
      %847 = vset.pattern.permute.xlu0 0
      %848 = vperm.xlu0 %847, %v836
      %v849 = vpop.permute.xlu0 %848
      %852 = vset.pattern.permute.xlu0 0
      %853 = vperm.xlu0 %852, %v837
      %v854 = vpop.permute.xlu0 %853
      %857 = vset.pattern.permute.xlu0 0
      %858 = vperm.xlu0 %857, %v838
      %v859 = vpop.permute.xlu0 %858
      %862 = vset.pattern.permute.xlu0 0
      %863 = vperm.xlu0 %862, %v839
      %v864 = vpop.permute.xlu0 %863
      %867 = vset.pattern.permute.xlu0 0
      %868 = vperm.xlu0 %867, %v840
      %v869 = vpop.permute.xlu0 %868
      %872 = vset.pattern.permute.xlu0 0
      %873 = vperm.xlu0 %872, %v841
      %v874 = vpop.permute.xlu0 %873
      %877 = vset.pattern.permute.xlu0 0
      %878 = vperm.xlu0 %877, %v842
      %v879 = vpop.permute.xlu0 %878
      %882 = vset.pattern.permute.xlu0 0
      %883 = vperm.xlu0 %882, %v843
      %v884 = vpop.permute.xlu0 %883
      %887 = vset.pattern.permute.xlu0 0
      %888 = vperm.xlu0 %887, %v844
      %v889 = vpop.permute.xlu0 %888
      %892 = vset.pattern.permute.xlu0 0
      %893 = vperm.xlu0 %892, %v845
      %v894 = vpop.permute.xlu0 %893
      %v896 = vmul.f32 %v826, %v849
      %v897 = vmul.f32 %v827, %v854
      %v898 = vmul.f32 %v828, %v859
      %v899 = vmul.f32 %v829, %v864
      %v900 = vmul.f32 %v830, %v869
      %v901 = vmul.f32 %v831, %v874
      %v902 = vmul.f32 %v832, %v879
      %v903 = vmul.f32 %v833, %v884
      %v904 = vmul.f32 %v834, %v889
      %v905 = vmul.f32 %v835, %v894
      %906 = vst [vmem:[%s244] sm:$0xff] 0.0
      %907 = vst [vmem:[%s248] sm:$0xff] 0.0
      %v908 = vadd.f32 %v896, %v897
      %v909 = vadd.f32 %v908, %v898
      %v910 = vadd.f32 %v909, %v899
      %v911 = vadd.f32 %v910, %v900
      %v912 = vadd.f32 %v911, %v901
      %v913 = vadd.f32 %v912, %v902
      %v914 = vadd.f32 %v913, %v903
      %v915 = vadd.f32 %v914, %v904
      %v916 = vadd.f32 %v915, %v905
      %v917 = vrot.slane %v916, 4
      %v918 = vadd.f32 %v916, %v917
      %v919 = vrot.slane %v918, 2
      %v920 = vadd.f32 %v918, %v919
      %v921 = vrot.slane %v920, 1
      %v922 = vadd.f32 %v920, %v921
      %923 = vst [vmem:[%s244] sm:$0x1] %v922
      %v924 = vmul.f32 %v896, %v826
      %v925 = vmul.f32 %v897, %v827
      %v926 = vmul.f32 %v898, %v828
      %v927 = vmul.f32 %v899, %v829
      %v928 = vmul.f32 %v900, %v830
      %v929 = vmul.f32 %v901, %v831
      %v930 = vmul.f32 %v902, %v832
      %v931 = vmul.f32 %v903, %v833
      %v932 = vmul.f32 %v904, %v834
      %v933 = vmul.f32 %v905, %v835
      %v934 = vadd.f32 %v924, %v925
      %v935 = vadd.f32 %v934, %v926
      %v936 = vadd.f32 %v935, %v927
      %v937 = vadd.f32 %v936, %v928
      %v938 = vadd.f32 %v937, %v929
      %v939 = vadd.f32 %v938, %v930
      %v940 = vadd.f32 %v939, %v931
      %v941 = vadd.f32 %v940, %v932
      %v942 = vadd.f32 %v941, %v933
      %v943 = vrot.slane %v942, 4
      %v944 = vadd.f32 %v942, %v943
      %v945 = vrot.slane %v944, 2
      %v946 = vadd.f32 %v944, %v945
      %v947 = vrot.slane %v946, 1
      %v948 = vadd.f32 %v946, %v947
      %949 = vst [vmem:[%s248] sm:$0x1] %v948
      %v950 = vpack.c.bf16 %v827, %v826
      %v951 = vpack.c.bf16 %v829, %v828
      %v952 = vpack.c.bf16 %v831, %v830
      %v953 = vpack.c.bf16 %v833, %v832
      %v954 = vpack.c.bf16 %v835, %v834
      %v960 = vunpack.c.l.b16 %v950
      %v961 = vunpack.c.h.b16 %v950
      %v962 = vunpack.c.l.b16 %v951
      %v963 = vunpack.c.h.b16 %v951
      %v964 = vunpack.c.l.b16 %v952
      %v965 = vunpack.c.h.b16 %v952
      %v966 = vunpack.c.l.b16 %v953
      %v967 = vunpack.c.h.b16 %v953
      %v968 = vunpack.c.l.b16 %v954
      %v969 = vunpack.c.h.b16 %v954
      %v970 = vpack.c.b16 %v960, %v960
      %v971 = vpack.c.b16 %v961, %v961
      %v972 = vpack.c.b16 %v962, %v962
      %v973 = vpack.c.b16 %v963, %v963
      %v974 = vpack.c.b16 %v964, %v964
      %v975 = vpack.c.b16 %v965, %v965
      %v976 = vpack.c.b16 %v966, %v966
      %v977 = vpack.c.b16 %v967, %v967
      %v978 = vpack.c.b16 %v968, %v968
      %v979 = vpack.c.b16 %v969, %v969
      %990 = vst [vmem:[%s239] sm:$0xf] %v970
      %991 = vst [vmem:[%s239 + $0x4] sm:$0xf] %v971
      %992 = vst [vmem:[%s239 + $0x8] sm:$0xf] %v972
      %993 = vst [vmem:[%s239 + $0xc] sm:$0xf] %v973
      %994 = vst [vmem:[%s239 + $0x10] sm:$0xf] %v974
      %995 = vst [vmem:[%s239 + $0x14] sm:$0xf] %v975
      %996 = vst [vmem:[%s239 + $0x18] sm:$0xf] %v976
      %997 = vst [vmem:[%s239 + $0x1c] sm:$0xf] %v977
      %998 = vst [vmem:[%s239 + $0x20] sm:$0xf] %v978
      %999 = vst [vmem:[%s239 + $0x24] sm:$0xf] %v979
      %s1000 = smul.u32 10, %s17
      %p1001 = scmp.lt.s32.totalorder %s1000, 19
      %s1002 = scalar_select %p1001, %s1000, 19
      %s1003 = smul.addr %s1002, 4
      %s1004 = scalar_lea.vmem %s3, %s1003
      %p1005 = scmp.lt.s32.totalorder %s17, 1
      %s1006 = scalar_select %p1005, %s17, 1
      %s1007 = smul.addr %s1006, 8
      %s1008 = scalar_lea.vmem %s4, %s1007
      %p1009 = scmp.lt.s32.totalorder %s17, 1
      %s1010 = scalar_select %p1009, %s17, 1
      %s1011 = smul.addr %s1010, 8
      %s1012 = scalar_lea.vmem %s5, %s1011
      // Predicated region
      $region33: #{conv_block_forward.2} parent=31 // pred_check
        %p1013 = pneg %p103
      $region34: #{conv_block_forward.2} parent=31 // pred_check_branch
        %1015 = sbr.rel (%p1013) target = $region36
      $region35: #{conv_block_forward.2} parent=31 // pred_region
        %s1016 = smul.u32 10, %s17
      $region36: #{conv_block_forward.2} parent=31 // pred_fallthru
        _
      // Predicated region
      $region37: #{conv_block_forward.2} parent=31 // pred_check
        %p1017 = pneg %p129
      $region38: #{conv_block_forward.2} parent=31 // pred_check_branch
        %1019 = sbr.rel (%p1017) target = $region40
      $region39: #{conv_block_forward.2} parent=31 // pred_region
        _
      $region40: #{conv_block_forward.2} parent=31 // pred_fallthru
        _
      // Predicated region
      $region41: #{conv_block_forward.2} parent=31 // pred_check
        %p1020 = pneg %p155
      $region42: #{conv_block_forward.2} parent=31 // pred_check_branch
        %1022 = sbr.rel (%p1020) target = $region44
      $region43: #{conv_block_forward.2} parent=31 // pred_region
        _
      $region44: #{conv_block_forward.2} parent=31 // pred_fallthru
        _
    $region32: #{conv_block_forward.2} parent=5 // pred_fallthru
      _
    %p1023 = scmp.le.s32.totalorder 2, %s12
    // Predicated region
    $region45: #{conv_block_forward.2} parent=5 // pred_check
      %p1024 = pneg %p1023
    $region46: #{conv_block_forward.2} parent=5 // pred_check_branch
      %1026 = sbr.rel (%p1024) target = $region48
    $region47: #{conv_block_forward.2} parent=5 // pred_region
      %s1027 = ssub.s32 %s12, 2
      // Predicated region
      $region49: #{conv_block_forward.2} parent=47 // pred_check
        %p1028 = pneg %p109
      $region50: #{conv_block_forward.2} parent=47 // pred_check_branch
        %1030 = sbr.rel (%p1028) target = $region52
      $region51: #{conv_block_forward.2} parent=47 // pred_region
        %s1031 = smul.u32 10, %s18
        %p1032 = scmp.lt.s32.totalorder %s1031, 19
        %s1033 = scalar_select %p1032, %s1031, 19
        %s1034 = smul.addr %s1033, 4
        %s1035 = scalar_lea.vmem %s3, %s1034
      $region52: #{conv_block_forward.2} parent=47 // pred_fallthru
        _
      // Predicated region
      $region53: #{conv_block_forward.2} parent=47 // pred_check
        %p1036 = pneg %p135
      $region54: #{conv_block_forward.2} parent=47 // pred_check_branch
        %1038 = sbr.rel (%p1036) target = $region56
      $region55: #{conv_block_forward.2} parent=47 // pred_region
        %p1039 = scmp.lt.s32.totalorder %s18, 1
        %s1040 = scalar_select %p1039, %s18, 1
        %s1041 = smul.addr %s1040, 8
        %s1042 = scalar_lea.vmem %s4, %s1041
      $region56: #{conv_block_forward.2} parent=47 // pred_fallthru
        _
      // Predicated region
      $region57: #{conv_block_forward.2} parent=47 // pred_check
        %p1043 = pneg %p161
      $region58: #{conv_block_forward.2} parent=47 // pred_check_branch
        %1045 = sbr.rel (%p1043) target = $region60
      $region59: #{conv_block_forward.2} parent=47 // pred_region
        %p1046 = scmp.lt.s32.totalorder %s18, 1
        %s1047 = scalar_select %p1046, %s18, 1
        %s1048 = smul.addr %s1047, 8
        %s1049 = scalar_lea.vmem %s5, %s1048
      $region60: #{conv_block_forward.2} parent=47 // pred_fallthru
        _
    $region48: #{conv_block_forward.2} parent=5 // pred_fallthru
      _
  $region6: #{conv_block_forward.2} parent=0 // loop_footer
    %s16 = sadd.s32 1, %s12
  $region7: #{conv_block_forward.2} parent=0 // loop_footer_branch
    %11 = sbr.rel target = $region3
  $region8: #{conv_block_forward.2} parent=0 // loop_exit
    _

</llo_original>
